<compile_context>
chip_gen: v6e
topology: v6e:2x2x1
jax: 0.10.0
libtpu: 0.0.40
codegen_flags: <defaults>
</compile_context>

<pallas_src>
import numpy as np
import jax
import jax.numpy as jnp
from jax.experimental import pallas as pl
from jax.experimental.pallas import tpu as pltpu


def _make_setblock_kernel(T, Cin, Cout, H, W):
    HW = H * W
    # Tap order k = ky*3+kx matches the host-side [Cout, 9*Cin] weight packing.
    # A 3x3 / pad=1 conv reads x at flat offset p + dy*W + dx for tap (dy,dx);
    # a lane roll by shift = (-(dy*W+dx)) % HW realizes that shift.  Wrapped
    # lanes are exactly the out-of-image lanes and are zeroed by the mask.
    taps = []
    for ky in range(3):
        for kx in range(3):
            d = (ky - 1) * W + (kx - 1)
            taps.append((ky * 3 + kx, (-d) % HW))

    def kernel(x_ref, w_ref, m_ref, o_ref):
        w_all = w_ref[...]      # [Cout, 9*Cin]  resident weights, read once
        m_all = m_ref[...]      # [9, HW]        resident boundary masks

        def frame(t, carry):
            x_f = x_ref[t]                                    # [Cin, HW]
            cols = []
            for k, shift in taps:                             # 9 static taps
                if shift == 0:
                    cols.append(x_f)                          # centre: mask==1
                else:
                    rolled = pltpu.roll(x_f, shift=shift, axis=1)   # XLU
                    cols.append(rolled * m_all[k:k + 1, :])
            col = jnp.concatenate(cols, axis=0)               # [9*Cin, HW]
            # One MXU pass per frame, K = 9*Cin, f32 accumulation.
            acc = jnp.dot(w_all, col, preferred_element_type=jnp.float32)
            acc = jnp.where(acc >= 0.0, acc, 0.01 * acc)      # LeakyReLU(0.01)
            o_ref[t] = acc.astype(o_ref.dtype)
            return carry

        jax.lax.fori_loop(0, T, frame, 0, unroll=True)

    return kernel


def _boundary_masks(H, W, dtype):
    # masks[k, p] = 1 iff pixel p's neighbour for tap k is inside the image.
    ys, xs = np.meshgrid(np.arange(H), np.arange(W), indexing="ij")
    masks = np.zeros((9, H * W), np.float32)
    for ky in range(3):
        for kx in range(3):
            dy, dx = ky - 1, kx - 1
            valid = ((ys + dy >= 0) & (ys + dy < H) &
                     (xs + dx >= 0) & (xs + dx < W))
            masks[ky * 3 + kx] = valid.reshape(-1)
    return jnp.asarray(masks, dtype=dtype)


def _vmem_estimate(T, Cin, Cout, HW, x_bytes, o_bytes):
    x_blk = T * Cin * HW * x_bytes
    o_blk = T * Cout * HW * o_bytes
    col = 9 * Cin * HW * 4 + Cout * HW * 4          # per-frame im2col + f32 acc
    const = Cout * 9 * Cin * 4 + 9 * HW * 4         # resident weights + masks
    return 2 * (x_blk + o_blk) + col + const        # 2x = double buffering


def _pick_frames_per_block(N, Cin, Cout, HW, x_bytes, o_bytes,
                           budget_bytes=20 * 1024 * 1024, cap=16):
    divisors = [t for t in range(1, min(N, cap) + 1) if N % t == 0]
    fitting = [t for t in divisors
               if _vmem_estimate(t, Cin, Cout, HW, x_bytes, o_bytes) <= budget_bytes]
    if not fitting:
        fitting = [1]
    # Prefer an even grid step count (ideally >= 4) so v7x's two TensorCores
    # both get work; then the largest T that fits the VMEM budget.
    for pred in (lambda t: (N // t) >= 4 and (N // t) % 2 == 0,
                 lambda t: (N // t) >= 2 and (N // t) % 2 == 0,
                 lambda t: (N // t) >= 2,
                 lambda t: True):
        cand = [t for t in fitting if pred(t)]
        if cand:
            return max(cand)
    return 1


def set_block_wrapper_forward(x, weight, *, frames_per_block=None):
    """SetBlockWrapper(BasicConv2d(3x3, pad=1, bias=False) -> LeakyReLU(0.01)).

    x:      [n, s, c_in, h, w]   (PyTorch NCHW frames)
    weight: [c_out, c_in, 3, 3]  (torch OIHW layout)
    returns [n, s, c_out, h, w]
    """
    n, s, Cin, H, W = x.shape
    Cout = weight.shape[0]
    assert weight.shape == (Cout, Cin, 3, 3)
    N = n * s
    HW = H * W

    # Fold set axis into batch: free reshape of the contiguous NCHW layout.
    xf = x.reshape(N, Cin, HW)

    # Pad channels to the sublane tile so the in-kernel im2col concatenation is
    # sublane-aligned (8 for 4-byte dtypes, 16 for 2-byte).  Padded channels
    # carry zero weights, so the result is unchanged.
    sublane = 8 * max(1, 4 // x.dtype.itemsize)
    Cin_p = ((Cin + sublane - 1) // sublane) * sublane
    if Cin_p != Cin:
        xf = jnp.pad(xf, ((0, 0), (0, Cin_p - Cin), (0, 0)))
        weight_p = jnp.pad(weight, ((0, 0), (0, Cin_p - Cin), (0, 0), (0, 0)))
    else:
        weight_p = weight

    # OIHW -> lane-dense [Cout, 9*Cin_p] with k = ky*3+kx major, Cin minor
    # (matches the kernel's im2col row order).
    wf = jnp.transpose(weight_p, (0, 2, 3, 1)).reshape(Cout, 9 * Cin_p)
    masks = _boundary_masks(H, W, x.dtype)              # [9, HW]

    T = frames_per_block or _pick_frames_per_block(
        N, Cin_p, Cout, HW, x.dtype.itemsize, x.dtype.itemsize)
    assert N % T == 0

    kernel = _make_setblock_kernel(T, Cin_p, Cout, H, W)

    cost = pl.CostEstimate(
        flops=2 * 9 * Cin_p * Cout * HW * N,
        transcendentals=0,
        bytes_accessed=(N * HW * (Cin_p + Cout) * x.dtype.itemsize
                        + int(wf.size) * wf.dtype.itemsize
                        + int(masks.size) * masks.dtype.itemsize),
    )

    out = pl.pallas_call(
        kernel,
        out_shape=jax.ShapeDtypeStruct((N, Cout, HW), x.dtype),
        grid_spec=pltpu.PrefetchScalarGridSpec(
            num_scalar_prefetch=0,
            grid=(N // T,),
            in_specs=[
                pl.BlockSpec((T, Cin_p, HW), lambda i: (i, 0, 0)),
                pl.BlockSpec((Cout, 9 * Cin_p), lambda i: (0, 0)),
                pl.BlockSpec((9, HW), lambda i: (0, 0)),
            ],
            out_specs=pl.BlockSpec((T, Cout, HW), lambda i: (i, 0, 0)),
        ),
        compiler_params=pltpu.CompilerParams(
            dimension_semantics=("parallel",),
            vmem_limit_bytes=40 * 1024 * 1024,
        ),
        cost_estimate=cost,
    )(xf, wf, masks)

    # Unfold back to [n, s, c_out, h, w] (free reshape; matches the module's
    # output_size = [n, s] + input_size[1:]).
    return out.reshape(n, s, Cout, H, W)


def _reference_numpy(x, weight):
    # Exact float64 reference of conv3x3(pad=1, no bias) + LeakyReLU(0.01),
    # applied per frame exactly like SetBlockWrapper does.
    xn = np.asarray(x, np.float64)
    wn = np.asarray(weight, np.float64)
    n, s, c, h, w = xn.shape
    cout = wn.shape[0]
    xf = xn.reshape(n * s, c, h, w)
    xp = np.pad(xf, ((0, 0), (0, 0), (1, 1), (1, 1)))
    out = np.zeros((n * s, cout, h, w), np.float64)
    for ky in range(3):
        for kx in range(3):
            patch = xp[:, :, ky:ky + h, kx:kx + w]
            out += np.einsum("oc,ncyx->noyx", wn[:, :, ky, kx], patch)
    out = np.where(out >= 0, out, 0.01 * out)
    return out.reshape(n, s, cout, h, w)


if __name__ == "__main__":
    key = jax.random.PRNGKey(0)
    n, s, Cin, H, W = 2, 8, 4, 16, 16
    Cout = 32
    k_x, k_w = jax.random.split(key)
    x = jax.random.normal(k_x, (n, s, Cin, H, W), dtype=jnp.float32)
    weight = 0.1 * jax.random.normal(k_w, (Cout, Cin, 3, 3), dtype=jnp.float32)

    # Round inputs to bf16-representable f32 values so the check is insensitive
    # to the MXU's f32 pass mode (products of bf16-representable values are
    # exact in f32).
    x = x.astype(jnp.bfloat16).astype(jnp.float32)
    weight = weight.astype(jnp.bfloat16).astype(jnp.float32)

    out = jax.block_until_ready(set_block_wrapper_forward(x, weight))

    ref = _reference_numpy(np.asarray(x), np.asarray(weight))
    assert out.shape == ref.shape, (out.shape, ref.shape)
    np.testing.assert_allclose(np.asarray(out), ref, rtol=1e-4, atol=1e-5)

    print("KERNEL_OK")
</pallas_src>

<mosaic_0001>
module attributes {stable_mosaic.version = 11 : i64} {
  func.func @kernel(%arg0: i32, %arg1: memref<4x8x256xf32, #tpu.memory_space<vmem>>, %arg2: memref<32x72xf32, #tpu.memory_space<vmem>>, %arg3: memref<9x256xf32, #tpu.memory_space<vmem>>, %arg4: memref<4x32x256xf32, #tpu.memory_space<vmem>>) attributes {dimension_semantics = [#tpu.dimension_semantics<parallel>], iteration_bounds = array<i64: 4>, scalar_prefetch = 0 : i64, scratch_operands = 0 : i64, tpu.core_type = #tpu.core_type<tc>, window_params = [{transform_indices = @transform_0, window_bounds = array<i64: 4, 8, 256>}, {pipeline_mode = #tpu.pipeline_mode<synchronous>, transform_indices = @transform_1, window_bounds = array<i64: 32, 72>}, {pipeline_mode = #tpu.pipeline_mode<synchronous>, transform_indices = @transform_2, window_bounds = array<i64: 9, 256>}, {transform_indices = @transform_3, window_bounds = array<i64: 4, 32, 256>}]} {
    %c0 = arith.constant 0 : index
    %c0_0 = arith.constant 0 : index
    %0 = vector.load %arg2[%c0, %c0_0] : memref<32x72xf32, #tpu.memory_space<vmem>>, vector<32x72xf32>
    %c0_1 = arith.constant 0 : index
    %c0_2 = arith.constant 0 : index
    %1 = vector.load %arg3[%c0_1, %c0_2] : memref<9x256xf32, #tpu.memory_space<vmem>>, vector<9x256xf32>
    %c0_i32 = arith.constant 0 : i32
    %2 = arith.index_cast %c0_i32 : i32 to index
    %c0_3 = arith.constant 0 : index
    %c0_4 = arith.constant 0 : index
    %3 = vector.load %arg1[%2, %c0_3, %c0_4] : memref<4x8x256xf32, #tpu.memory_space<vmem>>, vector<1x8x256xf32>
    %4 = vector.shape_cast %3 : vector<1x8x256xf32> to vector<8x256xf32>
    %c17_i32 = arith.constant 17 : i32
    %5 = tpu.dynamic_rotate %4 by %c17_i32 dim 1 : vector<8x256xf32>, i32 -> vector<8x256xf32>
    %6 = vector.extract_strided_slice %1 {offsets = [0, 0], sizes = [1, 256], strides = [1, 1]} : vector<9x256xf32> to vector<1x256xf32>
    %7 = vector.broadcast %6 : vector<1x256xf32> to vector<8x256xf32>
    %8 = arith.mulf %5, %7 : vector<8x256xf32>
    %c16_i32 = arith.constant 16 : i32
    %9 = tpu.dynamic_rotate %4 by %c16_i32 dim 1 : vector<8x256xf32>, i32 -> vector<8x256xf32>
    %10 = vector.extract_strided_slice %1 {offsets = [1, 0], sizes = [1, 256], strides = [1, 1]} : vector<9x256xf32> to vector<1x256xf32>
    %11 = vector.broadcast %10 : vector<1x256xf32> to vector<8x256xf32>
    %12 = arith.mulf %9, %11 : vector<8x256xf32>
    %c15_i32 = arith.constant 15 : i32
    %13 = tpu.dynamic_rotate %4 by %c15_i32 dim 1 : vector<8x256xf32>, i32 -> vector<8x256xf32>
    %14 = vector.extract_strided_slice %1 {offsets = [2, 0], sizes = [1, 256], strides = [1, 1]} : vector<9x256xf32> to vector<1x256xf32>
    %15 = vector.broadcast %14 : vector<1x256xf32> to vector<8x256xf32>
    %16 = arith.mulf %13, %15 : vector<8x256xf32>
    %c1_i32 = arith.constant 1 : i32
    %17 = tpu.dynamic_rotate %4 by %c1_i32 dim 1 : vector<8x256xf32>, i32 -> vector<8x256xf32>
    %18 = vector.extract_strided_slice %1 {offsets = [3, 0], sizes = [1, 256], strides = [1, 1]} : vector<9x256xf32> to vector<1x256xf32>
    %19 = vector.broadcast %18 : vector<1x256xf32> to vector<8x256xf32>
    %20 = arith.mulf %17, %19 : vector<8x256xf32>
    %c255_i32 = arith.constant 255 : i32
    %21 = tpu.dynamic_rotate %4 by %c255_i32 dim 1 : vector<8x256xf32>, i32 -> vector<8x256xf32>
    %22 = vector.extract_strided_slice %1 {offsets = [5, 0], sizes = [1, 256], strides = [1, 1]} : vector<9x256xf32> to vector<1x256xf32>
    %23 = vector.broadcast %22 : vector<1x256xf32> to vector<8x256xf32>
    %24 = arith.mulf %21, %23 : vector<8x256xf32>
    %c241_i32 = arith.constant 241 : i32
    %25 = tpu.dynamic_rotate %4 by %c241_i32 dim 1 : vector<8x256xf32>, i32 -> vector<8x256xf32>
    %26 = vector.extract_strided_slice %1 {offsets = [6, 0], sizes = [1, 256], strides = [1, 1]} : vector<9x256xf32> to vector<1x256xf32>
    %27 = vector.broadcast %26 : vector<1x256xf32> to vector<8x256xf32>
    %28 = arith.mulf %25, %27 : vector<8x256xf32>
    %c240_i32 = arith.constant 240 : i32
    %29 = tpu.dynamic_rotate %4 by %c240_i32 dim 1 : vector<8x256xf32>, i32 -> vector<8x256xf32>
    %30 = vector.extract_strided_slice %1 {offsets = [7, 0], sizes = [1, 256], strides = [1, 1]} : vector<9x256xf32> to vector<1x256xf32>
    %31 = vector.broadcast %30 : vector<1x256xf32> to vector<8x256xf32>
    %32 = arith.mulf %29, %31 : vector<8x256xf32>
    %c239_i32 = arith.constant 239 : i32
    %33 = tpu.dynamic_rotate %4 by %c239_i32 dim 1 : vector<8x256xf32>, i32 -> vector<8x256xf32>
    %34 = vector.extract_strided_slice %1 {offsets = [8, 0], sizes = [1, 256], strides = [1, 1]} : vector<9x256xf32> to vector<1x256xf32>
    %35 = vector.broadcast %34 : vector<1x256xf32> to vector<8x256xf32>
    %36 = arith.mulf %33, %35 : vector<8x256xf32>
    %37 = tpu.concatenate %8, %12, %16, %20, %4, %24, %28, %32, %36 in 0 : vector<8x256xf32>, vector<8x256xf32>, vector<8x256xf32>, vector<8x256xf32>, vector<8x256xf32>, vector<8x256xf32>, vector<8x256xf32>, vector<8x256xf32>, vector<8x256xf32> -> vector<72x256xf32>
    %cst = arith.constant dense<0.000000e+00> : vector<32x256xf32>
    %38 = tpu.matmul %0, %37, %cst {dimension_numbers = #tpu.dot_dimension_numbers<[1], [0], [0], [1], [0, 0, 1, 1], [], []>} : vector<32x72xf32>, vector<72x256xf32>, vector<32x256xf32> -> vector<32x256xf32>
    %cst_5 = arith.constant 0.000000e+00 : f32
    %39 = vector.broadcast %cst_5 : f32 to vector<32x256xf32>
    %40 = arith.cmpf oge, %38, %39 : vector<32x256xf32>
    %cst_6 = arith.constant 0.00999999977 : f32
    %41 = vector.broadcast %cst_6 : f32 to vector<32x256xf32>
    %42 = arith.mulf %41, %38 : vector<32x256xf32>
    %43 = arith.select %40, %38, %42 : vector<32x256xi1>, vector<32x256xf32>
    %44 = arith.index_cast %c0_i32 : i32 to index
    %c0_7 = arith.constant 0 : index
    %c0_8 = arith.constant 0 : index
    %45 = vector.load %arg4[%44, %c0_7, %c0_8] : memref<4x32x256xf32, #tpu.memory_space<vmem>>, vector<1x32x256xf32>
    %46 = vector.shape_cast %45 : vector<1x32x256xf32> to vector<32x256xf32>
    %47 = vector.shape_cast %43 : vector<32x256xf32> to vector<1x32x256xf32>
    tpu.vector_store %arg4[%44, %c0_7, %c0_8], %47 {strides = array<i32>} : memref<4x32x256xf32, #tpu.memory_space<vmem>>, vector<1x32x256xf32>,
    %c1_i32_9 = arith.constant 1 : i32
    %48 = arith.index_cast %c1_i32_9 : i32 to index
    %c0_10 = arith.constant 0 : index
    %c0_11 = arith.constant 0 : index
    %49 = vector.load %arg1[%48, %c0_10, %c0_11] : memref<4x8x256xf32, #tpu.memory_space<vmem>>, vector<1x8x256xf32>
    %50 = vector.shape_cast %49 : vector<1x8x256xf32> to vector<8x256xf32>
    %c17_i32_12 = arith.constant 17 : i32
    %51 = tpu.dynamic_rotate %50 by %c17_i32_12 dim 1 : vector<8x256xf32>, i32 -> vector<8x256xf32>
    %52 = vector.extract_strided_slice %1 {offsets = [0, 0], sizes = [1, 256], strides = [1, 1]} : vector<9x256xf32> to vector<1x256xf32>
    %53 = vector.broadcast %52 : vector<1x256xf32> to vector<8x256xf32>
    %54 = arith.mulf %51, %53 : vector<8x256xf32>
    %c16_i32_13 = arith.constant 16 : i32
    %55 = tpu.dynamic_rotate %50 by %c16_i32_13 dim 1 : vector<8x256xf32>, i32 -> vector<8x256xf32>
    %56 = vector.extract_strided_slice %1 {offsets = [1, 0], sizes = [1, 256], strides = [1, 1]} : vector<9x256xf32> to vector<1x256xf32>
    %57 = vector.broadcast %56 : vector<1x256xf32> to vector<8x256xf32>
    %58 = arith.mulf %55, %57 : vector<8x256xf32>
    %c15_i32_14 = arith.constant 15 : i32
    %59 = tpu.dynamic_rotate %50 by %c15_i32_14 dim 1 : vector<8x256xf32>, i32 -> vector<8x256xf32>
    %60 = vector.extract_strided_slice %1 {offsets = [2, 0], sizes = [1, 256], strides = [1, 1]} : vector<9x256xf32> to vector<1x256xf32>
    %61 = vector.broadcast %60 : vector<1x256xf32> to vector<8x256xf32>
    %62 = arith.mulf %59, %61 : vector<8x256xf32>
    %c1_i32_15 = arith.constant 1 : i32
    %63 = tpu.dynamic_rotate %50 by %c1_i32_15 dim 1 : vector<8x256xf32>, i32 -> vector<8x256xf32>
    %64 = vector.extract_strided_slice %1 {offsets = [3, 0], sizes = [1, 256], strides = [1, 1]} : vector<9x256xf32> to vector<1x256xf32>
    %65 = vector.broadcast %64 : vector<1x256xf32> to vector<8x256xf32>
    %66 = arith.mulf %63, %65 : vector<8x256xf32>
    %c255_i32_16 = arith.constant 255 : i32
    %67 = tpu.dynamic_rotate %50 by %c255_i32_16 dim 1 : vector<8x256xf32>, i32 -> vector<8x256xf32>
    %68 = vector.extract_strided_slice %1 {offsets = [5, 0], sizes = [1, 256], strides = [1, 1]} : vector<9x256xf32> to vector<1x256xf32>
    %69 = vector.broadcast %68 : vector<1x256xf32> to vector<8x256xf32>
    %70 = arith.mulf %67, %69 : vector<8x256xf32>
    %c241_i32_17 = arith.constant 241 : i32
    %71 = tpu.dynamic_rotate %50 by %c241_i32_17 dim 1 : vector<8x256xf32>, i32 -> vector<8x256xf32>
    %72 = vector.extract_strided_slice %1 {offsets = [6, 0], sizes = [1, 256], strides = [1, 1]} : vector<9x256xf32> to vector<1x256xf32>
    %73 = vector.broadcast %72 : vector<1x256xf32> to vector<8x256xf32>
    %74 = arith.mulf %71, %73 : vector<8x256xf32>
    %c240_i32_18 = arith.constant 240 : i32
    %75 = tpu.dynamic_rotate %50 by %c240_i32_18 dim 1 : vector<8x256xf32>, i32 -> vector<8x256xf32>
    %76 = vector.extract_strided_slice %1 {offsets = [7, 0], sizes = [1, 256], strides = [1, 1]} : vector<9x256xf32> to vector<1x256xf32>
    %77 = vector.broadcast %76 : vector<1x256xf32> to vector<8x256xf32>
    %78 = arith.mulf %75, %77 : vector<8x256xf32>
    %c239_i32_19 = arith.constant 239 : i32
    %79 = tpu.dynamic_rotate %50 by %c239_i32_19 dim 1 : vector<8x256xf32>, i32 -> vector<8x256xf32>
    %80 = vector.extract_strided_slice %1 {offsets = [8, 0], sizes = [1, 256], strides = [1, 1]} : vector<9x256xf32> to vector<1x256xf32>
    %81 = vector.broadcast %80 : vector<1x256xf32> to vector<8x256xf32>
    %82 = arith.mulf %79, %81 : vector<8x256xf32>
    %83 = tpu.concatenate %54, %58, %62, %66, %50, %70, %74, %78, %82 in 0 : vector<8x256xf32>, vector<8x256xf32>, vector<8x256xf32>, vector<8x256xf32>, vector<8x256xf32>, vector<8x256xf32>, vector<8x256xf32>, vector<8x256xf32>, vector<8x256xf32> -> vector<72x256xf32>
    %cst_20 = arith.constant dense<0.000000e+00> : vector<32x256xf32>
    %84 = tpu.matmul %0, %83, %cst_20 {dimension_numbers = #tpu.dot_dimension_numbers<[1], [0], [0], [1], [0, 0, 1, 1], [], []>} : vector<32x72xf32>, vector<72x256xf32>, vector<32x256xf32> -> vector<32x256xf32>
    %cst_21 = arith.constant 0.000000e+00 : f32
    %85 = vector.broadcast %cst_21 : f32 to vector<32x256xf32>
    %86 = arith.cmpf oge, %84, %85 : vector<32x256xf32>
    %cst_22 = arith.constant 0.00999999977 : f32
    %87 = vector.broadcast %cst_22 : f32 to vector<32x256xf32>
    %88 = arith.mulf %87, %84 : vector<32x256xf32>
    %89 = arith.select %86, %84, %88 : vector<32x256xi1>, vector<32x256xf32>
    %90 = arith.index_cast %c1_i32_9 : i32 to index
    %c0_23 = arith.constant 0 : index
    %c0_24 = arith.constant 0 : index
    %91 = vector.load %arg4[%90, %c0_23, %c0_24] : memref<4x32x256xf32, #tpu.memory_space<vmem>>, vector<1x32x256xf32>
    %92 = vector.shape_cast %91 : vector<1x32x256xf32> to vector<32x256xf32>
    %93 = vector.shape_cast %89 : vector<32x256xf32> to vector<1x32x256xf32>
    tpu.vector_store %arg4[%90, %c0_23, %c0_24], %93 {strides = array<i32>} : memref<4x32x256xf32, #tpu.memory_space<vmem>>, vector<1x32x256xf32>,
    %c2_i32 = arith.constant 2 : i32
    %94 = arith.index_cast %c2_i32 : i32 to index
    %c0_25 = arith.constant 0 : index
    %c0_26 = arith.constant 0 : index
    %95 = vector.load %arg1[%94, %c0_25, %c0_26] : memref<4x8x256xf32, #tpu.memory_space<vmem>>, vector<1x8x256xf32>
    %96 = vector.shape_cast %95 : vector<1x8x256xf32> to vector<8x256xf32>
    %c17_i32_27 = arith.constant 17 : i32
    %97 = tpu.dynamic_rotate %96 by %c17_i32_27 dim 1 : vector<8x256xf32>, i32 -> vector<8x256xf32>
    %98 = vector.extract_strided_slice %1 {offsets = [0, 0], sizes = [1, 256], strides = [1, 1]} : vector<9x256xf32> to vector<1x256xf32>
    %99 = vector.broadcast %98 : vector<1x256xf32> to vector<8x256xf32>
    %100 = arith.mulf %97, %99 : vector<8x256xf32>
    %c16_i32_28 = arith.constant 16 : i32
    %101 = tpu.dynamic_rotate %96 by %c16_i32_28 dim 1 : vector<8x256xf32>, i32 -> vector<8x256xf32>
    %102 = vector.extract_strided_slice %1 {offsets = [1, 0], sizes = [1, 256], strides = [1, 1]} : vector<9x256xf32> to vector<1x256xf32>
    %103 = vector.broadcast %102 : vector<1x256xf32> to vector<8x256xf32>
    %104 = arith.mulf %101, %103 : vector<8x256xf32>
    %c15_i32_29 = arith.constant 15 : i32
    %105 = tpu.dynamic_rotate %96 by %c15_i32_29 dim 1 : vector<8x256xf32>, i32 -> vector<8x256xf32>
    %106 = vector.extract_strided_slice %1 {offsets = [2, 0], sizes = [1, 256], strides = [1, 1]} : vector<9x256xf32> to vector<1x256xf32>
    %107 = vector.broadcast %106 : vector<1x256xf32> to vector<8x256xf32>
    %108 = arith.mulf %105, %107 : vector<8x256xf32>
    %c1_i32_30 = arith.constant 1 : i32
    %109 = tpu.dynamic_rotate %96 by %c1_i32_30 dim 1 : vector<8x256xf32>, i32 -> vector<8x256xf32>
    %110 = vector.extract_strided_slice %1 {offsets = [3, 0], sizes = [1, 256], strides = [1, 1]} : vector<9x256xf32> to vector<1x256xf32>
    %111 = vector.broadcast %110 : vector<1x256xf32> to vector<8x256xf32>
    %112 = arith.mulf %109, %111 : vector<8x256xf32>
    %c255_i32_31 = arith.constant 255 : i32
    %113 = tpu.dynamic_rotate %96 by %c255_i32_31 dim 1 : vector<8x256xf32>, i32 -> vector<8x256xf32>
    %114 = vector.extract_strided_slice %1 {offsets = [5, 0], sizes = [1, 256], strides = [1, 1]} : vector<9x256xf32> to vector<1x256xf32>
    %115 = vector.broadcast %114 : vector<1x256xf32> to vector<8x256xf32>
    %116 = arith.mulf %113, %115 : vector<8x256xf32>
    %c241_i32_32 = arith.constant 241 : i32
    %117 = tpu.dynamic_rotate %96 by %c241_i32_32 dim 1 : vector<8x256xf32>, i32 -> vector<8x256xf32>
    %118 = vector.extract_strided_slice %1 {offsets = [6, 0], sizes = [1, 256], strides = [1, 1]} : vector<9x256xf32> to vector<1x256xf32>
    %119 = vector.broadcast %118 : vector<1x256xf32> to vector<8x256xf32>
    %120 = arith.mulf %117, %119 : vector<8x256xf32>
    %c240_i32_33 = arith.constant 240 : i32
    %121 = tpu.dynamic_rotate %96 by %c240_i32_33 dim 1 : vector<8x256xf32>, i32 -> vector<8x256xf32>
    %122 = vector.extract_strided_slice %1 {offsets = [7, 0], sizes = [1, 256], strides = [1, 1]} : vector<9x256xf32> to vector<1x256xf32>
    %123 = vector.broadcast %122 : vector<1x256xf32> to vector<8x256xf32>
    %124 = arith.mulf %121, %123 : vector<8x256xf32>
    %c239_i32_34 = arith.constant 239 : i32
    %125 = tpu.dynamic_rotate %96 by %c239_i32_34 dim 1 : vector<8x256xf32>, i32 -> vector<8x256xf32>
    %126 = vector.extract_strided_slice %1 {offsets = [8, 0], sizes = [1, 256], strides = [1, 1]} : vector<9x256xf32> to vector<1x256xf32>
    %127 = vector.broadcast %126 : vector<1x256xf32> to vector<8x256xf32>
    %128 = arith.mulf %125, %127 : vector<8x256xf32>
    %129 = tpu.concatenate %100, %104, %108, %112, %96, %116, %120, %124, %128 in 0 : vector<8x256xf32>, vector<8x256xf32>, vector<8x256xf32>, vector<8x256xf32>, vector<8x256xf32>, vector<8x256xf32>, vector<8x256xf32>, vector<8x256xf32>, vector<8x256xf32> -> vector<72x256xf32>
    %cst_35 = arith.constant dense<0.000000e+00> : vector<32x256xf32>
    %130 = tpu.matmul %0, %129, %cst_35 {dimension_numbers = #tpu.dot_dimension_numbers<[1], [0], [0], [1], [0, 0, 1, 1], [], []>} : vector<32x72xf32>, vector<72x256xf32>, vector<32x256xf32> -> vector<32x256xf32>
    %cst_36 = arith.constant 0.000000e+00 : f32
    %131 = vector.broadcast %cst_36 : f32 to vector<32x256xf32>
    %132 = arith.cmpf oge, %130, %131 : vector<32x256xf32>
    %cst_37 = arith.constant 0.00999999977 : f32
    %133 = vector.broadcast %cst_37 : f32 to vector<32x256xf32>
    %134 = arith.mulf %133, %130 : vector<32x256xf32>
    %135 = arith.select %132, %130, %134 : vector<32x256xi1>, vector<32x256xf32>
    %136 = arith.index_cast %c2_i32 : i32 to index
    %c0_38 = arith.constant 0 : index
    %c0_39 = arith.constant 0 : index
    %137 = vector.load %arg4[%136, %c0_38, %c0_39] : memref<4x32x256xf32, #tpu.memory_space<vmem>>, vector<1x32x256xf32>
    %138 = vector.shape_cast %137 : vector<1x32x256xf32> to vector<32x256xf32>
    %139 = vector.shape_cast %135 : vector<32x256xf32> to vector<1x32x256xf32>
    tpu.vector_store %arg4[%136, %c0_38, %c0_39], %139 {strides = array<i32>} : memref<4x32x256xf32, #tpu.memory_space<vmem>>, vector<1x32x256xf32>,
    %c3_i32 = arith.constant 3 : i32
    %140 = arith.index_cast %c3_i32 : i32 to index
    %c0_40 = arith.constant 0 : index
    %c0_41 = arith.constant 0 : index
    %141 = vector.load %arg1[%140, %c0_40, %c0_41] : memref<4x8x256xf32, #tpu.memory_space<vmem>>, vector<1x8x256xf32>
    %142 = vector.shape_cast %141 : vector<1x8x256xf32> to vector<8x256xf32>
    %c17_i32_42 = arith.constant 17 : i32
    %143 = tpu.dynamic_rotate %142 by %c17_i32_42 dim 1 : vector<8x256xf32>, i32 -> vector<8x256xf32>
    %144 = vector.extract_strided_slice %1 {offsets = [0, 0], sizes = [1, 256], strides = [1, 1]} : vector<9x256xf32> to vector<1x256xf32>
    %145 = vector.broadcast %144 : vector<1x256xf32> to vector<8x256xf32>
    %146 = arith.mulf %143, %145 : vector<8x256xf32>
    %c16_i32_43 = arith.constant 16 : i32
    %147 = tpu.dynamic_rotate %142 by %c16_i32_43 dim 1 : vector<8x256xf32>, i32 -> vector<8x256xf32>
    %148 = vector.extract_strided_slice %1 {offsets = [1, 0], sizes = [1, 256], strides = [1, 1]} : vector<9x256xf32> to vector<1x256xf32>
    %149 = vector.broadcast %148 : vector<1x256xf32> to vector<8x256xf32>
    %150 = arith.mulf %147, %149 : vector<8x256xf32>
    %c15_i32_44 = arith.constant 15 : i32
    %151 = tpu.dynamic_rotate %142 by %c15_i32_44 dim 1 : vector<8x256xf32>, i32 -> vector<8x256xf32>
    %152 = vector.extract_strided_slice %1 {offsets = [2, 0], sizes = [1, 256], strides = [1, 1]} : vector<9x256xf32> to vector<1x256xf32>
    %153 = vector.broadcast %152 : vector<1x256xf32> to vector<8x256xf32>
    %154 = arith.mulf %151, %153 : vector<8x256xf32>
    %c1_i32_45 = arith.constant 1 : i32
    %155 = tpu.dynamic_rotate %142 by %c1_i32_45 dim 1 : vector<8x256xf32>, i32 -> vector<8x256xf32>
    %156 = vector.extract_strided_slice %1 {offsets = [3, 0], sizes = [1, 256], strides = [1, 1]} : vector<9x256xf32> to vector<1x256xf32>
    %157 = vector.broadcast %156 : vector<1x256xf32> to vector<8x256xf32>
    %158 = arith.mulf %155, %157 : vector<8x256xf32>
    %c255_i32_46 = arith.constant 255 : i32
    %159 = tpu.dynamic_rotate %142 by %c255_i32_46 dim 1 : vector<8x256xf32>, i32 -> vector<8x256xf32>
    %160 = vector.extract_strided_slice %1 {offsets = [5, 0], sizes = [1, 256], strides = [1, 1]} : vector<9x256xf32> to vector<1x256xf32>
    %161 = vector.broadcast %160 : vector<1x256xf32> to vector<8x256xf32>
    %162 = arith.mulf %159, %161 : vector<8x256xf32>
    %c241_i32_47 = arith.constant 241 : i32
    %163 = tpu.dynamic_rotate %142 by %c241_i32_47 dim 1 : vector<8x256xf32>, i32 -> vector<8x256xf32>
    %164 = vector.extract_strided_slice %1 {offsets = [6, 0], sizes = [1, 256], strides = [1, 1]} : vector<9x256xf32> to vector<1x256xf32>
    %165 = vector.broadcast %164 : vector<1x256xf32> to vector<8x256xf32>
    %166 = arith.mulf %163, %165 : vector<8x256xf32>
    %c240_i32_48 = arith.constant 240 : i32
    %167 = tpu.dynamic_rotate %142 by %c240_i32_48 dim 1 : vector<8x256xf32>, i32 -> vector<8x256xf32>
    %168 = vector.extract_strided_slice %1 {offsets = [7, 0], sizes = [1, 256], strides = [1, 1]} : vector<9x256xf32> to vector<1x256xf32>
    %169 = vector.broadcast %168 : vector<1x256xf32> to vector<8x256xf32>
    %170 = arith.mulf %167, %169 : vector<8x256xf32>
    %c239_i32_49 = arith.constant 239 : i32
    %171 = tpu.dynamic_rotate %142 by %c239_i32_49 dim 1 : vector<8x256xf32>, i32 -> vector<8x256xf32>
    %172 = vector.extract_strided_slice %1 {offsets = [8, 0], sizes = [1, 256], strides = [1, 1]} : vector<9x256xf32> to vector<1x256xf32>
    %173 = vector.broadcast %172 : vector<1x256xf32> to vector<8x256xf32>
    %174 = arith.mulf %171, %173 : vector<8x256xf32>
    %175 = tpu.concatenate %146, %150, %154, %158, %142, %162, %166, %170, %174 in 0 : vector<8x256xf32>, vector<8x256xf32>, vector<8x256xf32>, vector<8x256xf32>, vector<8x256xf32>, vector<8x256xf32>, vector<8x256xf32>, vector<8x256xf32>, vector<8x256xf32> -> vector<72x256xf32>
    %cst_50 = arith.constant dense<0.000000e+00> : vector<32x256xf32>
    %176 = tpu.matmul %0, %175, %cst_50 {dimension_numbers = #tpu.dot_dimension_numbers<[1], [0], [0], [1], [0, 0, 1, 1], [], []>} : vector<32x72xf32>, vector<72x256xf32>, vector<32x256xf32> -> vector<32x256xf32>
    %cst_51 = arith.constant 0.000000e+00 : f32
    %177 = vector.broadcast %cst_51 : f32 to vector<32x256xf32>
    %178 = arith.cmpf oge, %176, %177 : vector<32x256xf32>
    %cst_52 = arith.constant 0.00999999977 : f32
    %179 = vector.broadcast %cst_52 : f32 to vector<32x256xf32>
    %180 = arith.mulf %179, %176 : vector<32x256xf32>
    %181 = arith.select %178, %176, %180 : vector<32x256xi1>, vector<32x256xf32>
    %182 = arith.index_cast %c3_i32 : i32 to index
    %c0_53 = arith.constant 0 : index
    %c0_54 = arith.constant 0 : index
    %183 = vector.load %arg4[%182, %c0_53, %c0_54] : memref<4x32x256xf32, #tpu.memory_space<vmem>>, vector<1x32x256xf32>
    %184 = vector.shape_cast %183 : vector<1x32x256xf32> to vector<32x256xf32>
    %185 = vector.shape_cast %181 : vector<32x256xf32> to vector<1x32x256xf32>
    tpu.vector_store %arg4[%182, %c0_53, %c0_54], %185 {strides = array<i32>} : memref<4x32x256xf32, #tpu.memory_space<vmem>>, vector<1x32x256xf32>,
    %c4_i32 = arith.constant 4 : i32
    return
  }
  func.func @transform_0(%arg0: i32) -> (i32, i32, i32) {
    %c0_i32 = arith.constant 0 : i32
    %c0_i32_0 = arith.constant 0 : i32
    %c0_i32_1 = arith.constant 0 : i32
    return %arg0, %c0_i32, %c0_i32_0 : i32, i32, i32
  }
  func.func @transform_1(%arg0: i32) -> (i32, i32) {
    %c0_i32 = arith.constant 0 : i32
    %c0_i32_0 = arith.constant 0 : i32
    %c0_i32_1 = arith.constant 0 : i32
    return %c0_i32, %c0_i32_0 : i32, i32
  }
  func.func @transform_2(%arg0: i32) -> (i32, i32) {
    %c0_i32 = arith.constant 0 : i32
    %c0_i32_0 = arith.constant 0 : i32
    %c0_i32_1 = arith.constant 0 : i32
    return %c0_i32, %c0_i32_0 : i32, i32
  }
  func.func @transform_3(%arg0: i32) -> (i32, i32, i32) {
    %c0_i32 = arith.constant 0 : i32
    %c0_i32_0 = arith.constant 0 : i32
    %c0_i32_1 = arith.constant 0 : i32
    return %arg0, %c0_i32, %c0_i32_0 : i32, i32, i32
  }
}

</mosaic_0001>

<llo_original>
// kernel: tpu_custom_call.1
$region0: #{tpu_custom_call.1}
  #allocation0 [shape = 'u32[]', space=smem, size = 0x4, offset = 0x4, fixed_abs, tag = 'smem constant byte address 0x4 - core index']
  #allocation1 [shape = 'u32[144,128]{1,0:T(1,128)}', space=vmem, size = 0x12000, scoped, tag = 'internal scratch']
  %s0 = inlined_call_operand.hbm [shape: f32[16,8,256], index: 0, kind: input, shape index: {}]
  %s1 = inlined_call_operand.hbm [shape: f32[32,72], index: 1, kind: input, shape index: {}]
  %s2 = inlined_call_operand.hbm [shape: f32[9,256], index: 2, kind: input, shape index: {}]
  %s3 = inlined_call_operand.hbm [shape: f32[16,32,256], index: 3, kind: output, shape index: {}]
  %s4 = sld [smem:[#allocation0]]
  $region57: #{tpu_custom_call.1} parent=0
    _
  %s6 = ssub.s32 1, %s4
  %s7 = scalar_select 0, %s6, %s4
  $region1: #{tpu_custom_call.1} parent=0
    #allocation2 [shape = 'u8[65536]{0}', space=vmem, size = 0x10000, scoped, tag = 'input window, operand 0']
    #allocation3 [shape = 's32[2]{0}', space=sflag, size = 0x8, scoped, tag = 'scoped memory for tpu_custom_call.1']
    #allocation4 [shape = 's32[2]{0}', space=sflag, size = 0x8, scoped, tag = 'scoped memory for tpu_custom_call.1']
    #allocation5 [shape = 'u8[16384]{0}', space=vmem, size = 0x4000, scoped, tag = 'input window, operand 1, single buffered']
    #allocation6 [shape = 's32[1]{0}', space=sflag, size = 0x4, scoped, tag = 'scoped memory for tpu_custom_call.1']
    #allocation7 [shape = 'u8[16384]{0}', space=vmem, size = 0x4000, scoped, tag = 'input window, operand 2, single buffered']
    #allocation8 [shape = 'u8[262144]{0}', space=vmem, size = 0x40000, scoped, tag = 'output window, operand 0']
    %8 = vsyncpa [#allocation3], 0
    %s9 = scalar_lea.sflag [#allocation3], 1
    %10 = vsyncpa %s9, 0
    %11 = vsyncpa [#allocation6], 0
    %12 = vsyncpa [#allocation4], 0
    %s13 = scalar_lea.sflag [#allocation4], 1
    %14 = vsyncpa %s13, 0
    loop: start=0, step=1, limit=6
    $region2: #{tpu_custom_call.1} parent=1 // loop_pre_header
      _
    $region3: #{tpu_custom_call.1} parent=1 // loop_header
      %s16 = sphi 0, %s20
      %p17 = scmp.ge.s32.totalorder %s16, 6
      %s26 = sphi 0, %s28
      %s29 = sphi 0, %s26
      %s30 = sphi 0, %s29
      %s46 = sphi 0, %s30
      %s50 = sphi 0, %s50
      %s52 = sphi 0, %s50
      %s53 = sphi 0, %s52
      %s67 = sphi 0, %s53
      %s71 = sphi 0, %s71
      %s73 = sphi 0, %s71
      %s74 = sphi 0, %s73
      %s88 = sphi 0, %s74
      %s94 = sphi 0, %s96
      %s97 = sphi 0, %s94
      %s98 = sphi 0, %s97
      %s114 = sphi 0, %s98
    $region4: #{tpu_custom_call.1} parent=1 // loop_header_branch
      %19 = sbr.rel (%p17) target = $region8
    $region5: #{tpu_custom_call.1} parent=1 // loop_body
      %s21 = ssub.s32 %s16, 1
      %s22 = ssub.s32 %s16, 2
      %s23 = sadd.s32 %s16, 1
      %s24 = ssub.s32 %s16, %s23
      %p25 = scmp.eq.s32.totalorder %s24, 0
      %s27 = sadd.s32 %s26, 1
      %s28 = scalar_select %p25, %s26, %s27
      %p31 = pneg %p25
      %p32 = scmp.eq.s32.totalorder %s16, 3
      %p33 = por %p31, %p32
      %p34 = scmp.ne.s32.totalorder %s26, %s29
      %p35 = scmp.eq.s32.totalorder %s16, 0
      %p36 = por %p34, %p35
      %p37 = scmp.ne.s32.totalorder %s26, %s29
      %p38 = scmp.eq.s32.totalorder %s21, 3
      %p39 = por %p37, %p38
      %p40 = scmp.ne.s32.totalorder %s29, %s30
      %p41 = scmp.eq.s32.totalorder %s21, 0
      %p42 = por %p40, %p41
      %p43 = scmp.ne.s32.totalorder %s29, %s30
      %p44 = scmp.eq.s32.totalorder %s22, 3
      %p45 = por %p43, %p44
      %p47 = scmp.ne.s32.totalorder %s30, %s46
      %p48 = scmp.eq.s32.totalorder %s22, 0
      %p49 = por %p47, %p48
      %s51 = sadd.s32 %s50, 1
      %p54 = scmp.eq.s32.totalorder %s16, 3
      %p55 = scmp.ne.s32.totalorder %s50, %s52
      %p56 = scmp.eq.s32.totalorder %s16, 0
      %p57 = por %p55, %p56
      %p58 = scmp.ne.s32.totalorder %s50, %s52
      %p59 = scmp.eq.s32.totalorder %s21, 3
      %p60 = por %p58, %p59
      %p61 = scmp.ne.s32.totalorder %s52, %s53
      %p62 = scmp.eq.s32.totalorder %s21, 0
      %p63 = por %p61, %p62
      %p64 = scmp.ne.s32.totalorder %s52, %s53
      %p65 = scmp.eq.s32.totalorder %s22, 3
      %p66 = por %p64, %p65
      %p68 = scmp.ne.s32.totalorder %s53, %s67
      %p69 = scmp.eq.s32.totalorder %s22, 0
      %p70 = por %p68, %p69
      %s72 = sadd.s32 %s71, 1
      %p75 = scmp.eq.s32.totalorder %s16, 3
      %p76 = scmp.ne.s32.totalorder %s71, %s73
      %p77 = scmp.eq.s32.totalorder %s16, 0
      %p78 = por %p76, %p77
      %p79 = scmp.ne.s32.totalorder %s71, %s73
      %p80 = scmp.eq.s32.totalorder %s21, 3
      %p81 = por %p79, %p80
      %p82 = scmp.ne.s32.totalorder %s73, %s74
      %p83 = scmp.eq.s32.totalorder %s21, 0
      %p84 = por %p82, %p83
      %p85 = scmp.ne.s32.totalorder %s73, %s74
      %p86 = scmp.eq.s32.totalorder %s22, 3
      %p87 = por %p85, %p86
      %p89 = scmp.ne.s32.totalorder %s74, %s88
      %p90 = scmp.eq.s32.totalorder %s22, 0
      %p91 = por %p89, %p90
      %s92 = ssub.s32 %s16, %s23
      %p93 = scmp.eq.s32.totalorder %s92, 0
      %s95 = sadd.s32 %s94, 1
      %s96 = scalar_select %p93, %s94, %s95
      %p99 = pneg %p93
      %p100 = scmp.eq.s32.totalorder %s16, 3
      %p101 = por %p99, %p100
      %p102 = scmp.ne.s32.totalorder %s94, %s97
      %p103 = scmp.eq.s32.totalorder %s16, 0
      %p104 = por %p102, %p103
      %p105 = scmp.ne.s32.totalorder %s94, %s97
      %p106 = scmp.eq.s32.totalorder %s21, 3
      %p107 = por %p105, %p106
      %p108 = scmp.ne.s32.totalorder %s97, %s98
      %p109 = scmp.eq.s32.totalorder %s21, 0
      %p110 = por %p108, %p109
      %p111 = scmp.ne.s32.totalorder %s97, %s98
      %p112 = scmp.eq.s32.totalorder %s22, 3
      %p113 = por %p111, %p112
      %p115 = scmp.ne.s32.totalorder %s98, %s114
      %p116 = scmp.eq.s32.totalorder %s22, 0
      %p117 = por %p115, %p116
      %p118 = scmp.le.s32.totalorder 1, %s16
      %p119 = scmp.lt.s32.totalorder %s16, 5
      %p120 = pnand %p118, %p119
      %p121 = pneg %p120
      // Predicated region
      $region9: #{tpu_custom_call.1} parent=5 // pred_check
        _
      $region10: #{tpu_custom_call.1} parent=5 // pred_check_branch
        %123 = sbr.rel (%p120) target = $region12
      $region11: #{tpu_custom_call.1} parent=5 // pred_region
        %s124 = ssub.s32 %s16, 1
        // Predicated region
        $region13: #{tpu_custom_call.1} parent=11 // pred_check
          %p125 = pneg %p63
        $region14: #{tpu_custom_call.1} parent=11 // pred_check_branch
          %127 = sbr.rel (%p125) target = $region16
        $region15: #{tpu_custom_call.1} parent=11 // pred_region
          %s129 = ssub.s32 512, 512
          %130 = vsyncadd [#allocation6], %s129
          %s131 = sshll.u32 [#allocation5], 4
          %s132 = int_to_ptr.vmem [resolvable:$true] %s131
          %137 = dma.hbm_to_vmem [thread:$0]  %s1, 512, %s132, [#allocation6], 128, 128, 8
        $region16: #{tpu_custom_call.1} parent=11 // pred_fallthru
          _
        // Predicated region
        $region17: #{tpu_custom_call.1} parent=11 // pred_check
          %p138 = pneg %p84
        $region18: #{tpu_custom_call.1} parent=11 // pred_check_branch
          %140 = sbr.rel (%p138) target = $region20
        $region19: #{tpu_custom_call.1} parent=11 // pred_region
          %s142 = ssub.s32 512, 512
          %143 = vsyncadd [#allocation6], %s142
          %s144 = sshll.u32 [#allocation7], 4
          %s145 = int_to_ptr.vmem [resolvable:$true] %s144
          %150 = dma.hbm_to_vmem [thread:$0]  %s2, 512, %s145, [#allocation6], 256, 256, 16
        $region20: #{tpu_custom_call.1} parent=11 // pred_fallthru
          _
      $region12: #{tpu_custom_call.1} parent=5 // pred_fallthru
        _
      %p151 = scmp.lt.s32.totalorder %s16, 4
      // Predicated region
      $region21: #{tpu_custom_call.1} parent=5 // pred_check
        %p152 = pneg %p151
      $region22: #{tpu_custom_call.1} parent=5 // pred_check_branch
        %154 = sbr.rel (%p152) target = $region24
      $region23: #{tpu_custom_call.1} parent=5 // pred_region
        // Predicated region
        $region25: #{tpu_custom_call.1} parent=23 // pred_check
          %p155 = pneg %p36
        $region26: #{tpu_custom_call.1} parent=23 // pred_check_branch
          %157 = sbr.rel (%p155) target = $region28
        $region27: #{tpu_custom_call.1} parent=23 // pred_region
          %s158 = sand.u32 %s26, 1
          %s159 = scalar_lea.sflag [#allocation3], %s158
          %s160 = sand.u32 %s26, 1
          %s161 = smul.addr %s160, 64
          %s162 = scalar_lea.vmem [#allocation2], %s161
          %s163 = smul.u32 4, %s16
          %s165 = ssub.s32 1024, 1024
          %166 = vsyncadd %s159, %s165
          %s167 = smul.addr %s163, 2
          %s168 = smul.addr %s167, 128
          %s169 = scalar_lea.hbm %s0, %s168
          %s170 = sshll.u32 %s162, 4
          %s171 = int_to_ptr.vmem [resolvable:$true] %s170
          %176 = dma.hbm_to_vmem [thread:$0]  %s169, 1024, %s171, %s159, 256, 256, 16
        $region28: #{tpu_custom_call.1} parent=23 // pred_fallthru
          _
      $region24: #{tpu_custom_call.1} parent=5 // pred_fallthru
        _
      %p177 = scmp.le.s32.totalorder 1, %s16
      %p178 = scmp.lt.s32.totalorder %s16, 5
      %p179 = pnand %p177, %p178
      %p180 = pneg %p179
      // Predicated region
      $region29: #{tpu_custom_call.1} parent=5 // pred_check
        _
      $region30: #{tpu_custom_call.1} parent=5 // pred_check_branch
        %182 = sbr.rel (%p179) target = $region32
      $region31: #{tpu_custom_call.1} parent=5 // pred_region
        %s183 = ssub.s32 %s16, 1
        %s184 = sand.u32 %s29, 1
        %s185 = scalar_lea.sflag [#allocation3], %s184
        %s186 = sand.u32 %s29, 1
        %s187 = smul.addr %s186, 64
        %s188 = scalar_lea.vmem [#allocation2], %s187
        // Predicated region
        $region33: #{tpu_custom_call.1} parent=31 // pred_check
          %p189 = pneg %p42
        $region34: #{tpu_custom_call.1} parent=31 // pred_check_branch
          %191 = sbr.rel (%p189) target = $region36
        $region35: #{tpu_custom_call.1} parent=31 // pred_region
          %192 = dma.done %s185, 1024
        $region36: #{tpu_custom_call.1} parent=31 // pred_fallthru
          _
        // Predicated region
        $region37: #{tpu_custom_call.1} parent=31 // pred_check
          %p193 = pneg %p63
        $region38: #{tpu_custom_call.1} parent=31 // pred_check_branch
          %195 = sbr.rel (%p193) target = $region40
        $region39: #{tpu_custom_call.1} parent=31 // pred_region
          %196 = dma.done [#allocation6], 512
        $region40: #{tpu_custom_call.1} parent=31 // pred_fallthru
          _
        // Predicated region
        $region41: #{tpu_custom_call.1} parent=31 // pred_check
          %p197 = pneg %p84
        $region42: #{tpu_custom_call.1} parent=31 // pred_check_branch
          %199 = sbr.rel (%p197) target = $region44
        $region43: #{tpu_custom_call.1} parent=31 // pred_region
          %200 = dma.done [#allocation6], 512
        $region44: #{tpu_custom_call.1} parent=31 // pred_fallthru
          _
        %s201 = sand.u32 %s29, 1
        %s202 = scalar_lea.sflag [#allocation3], %s201
        %s203 = sand.u32 %s29, 1
        %s204 = smul.addr %s203, 64
        %s205 = scalar_lea.vmem [#allocation2], %s204
        %p206 = pneg %p42
        %p207 = pneg %p39
        %p208 = pneg %p63
        %p209 = pneg %p60
        %p210 = pneg %p84
        %p211 = pneg %p81
        %p212 = pneg %p110
        %p213 = pneg %p107
        %s214 = sand.u32 %s97, 1
        %s215 = scalar_lea.sflag [#allocation4], %s214
        %s216 = sand.u32 %s97, 1
        %s217 = smul.addr %s216, 256
        %s218 = scalar_lea.vmem [#allocation8], %s217
        %s219 = smul.u32 4, %s21
        %s220 = smul.u32 4, %s21
        %v221 = vld [vmem:[#allocation5] sm:$0xff]
        %v222 = vld [vmem:[#allocation5 + $0x8] sm:$0xff]
        %v223 = vld [vmem:[#allocation5 + $0x10] sm:$0xff]
        %v224 = vld [vmem:[#allocation5 + $0x18] sm:$0xff]
        %v225 = vld [vmem:[#allocation7] sm:$0xff]
        %v226 = vld [vmem:[#allocation7 + $0x8] sm:$0xff]
        %v227 = vld [vmem:[#allocation7 + $0x10] sm:$0x1]
        %v228 = vld [vmem:[#allocation7 + $0x18] sm:$0x1]
        %v229 = vld [vmem:[%s188] sm:$0xff]
        %v230 = vld [vmem:[%s188 + $0x8] sm:$0xff]
        %231 = vrot.lane.b32.xlu0 %v229, 17
        %v232 = vpop.permute.xlu0 %231
        %233 = vrot.lane.b32.xlu0 %v230, 17
        %v234 = vpop.permute.xlu0 %233
        %v235 = vlaneseq
        %v236 = vand.u32 %v235, 127
        %vm237 = vcmp.lt.s32.totalorder %v236, 17
        %v238 = vsel %vm237, %v232, %v234
        %v239 = vsel %vm237, %v234, %v232
        %v240 = vlaneseq
        %v241 = vshrl.u32 %v240, 7
        %v242 = vsub.s32 0, %v241
        %v243 = vrot.slane %v225, %v242
        %v244 = vlaneseq
        %v245 = vshrl.u32 %v244, 7
        %v246 = vsub.s32 0, %v245
        %v247 = vrot.slane %v226, %v246
        %v248 = vmul.f32 %v239, %v243
        %v249 = vmul.f32 %v238, %v247
        %250 = vrot.lane.b32.xlu0 %v229, 16
        %v251 = vpop.permute.xlu0 %250
        %252 = vrot.lane.b32.xlu0 %v230, 16
        %v253 = vpop.permute.xlu0 %252
        %vm254 = vcmp.lt.s32.totalorder %v236, 16
        %v255 = vsel %vm254, %v251, %v253
        %v256 = vsel %vm254, %v253, %v251
        %v257 = vlaneseq
        %v258 = vshrl.u32 %v257, 7
        %v259 = vsub.s32 1, %v258
        %v260 = vrot.slane %v225, %v259
        %v261 = vlaneseq
        %v262 = vshrl.u32 %v261, 7
        %v263 = vsub.s32 1, %v262
        %v264 = vrot.slane %v226, %v263
        %v265 = vmul.f32 %v256, %v260
        %v266 = vmul.f32 %v255, %v264
        %267 = vrot.lane.b32.xlu0 %v229, 15
        %v268 = vpop.permute.xlu0 %267
        %269 = vrot.lane.b32.xlu0 %v230, 15
        %v270 = vpop.permute.xlu0 %269
        %vm271 = vcmp.lt.s32.totalorder %v236, 15
        %v272 = vsel %vm271, %v268, %v270
        %v273 = vsel %vm271, %v270, %v268
        %v274 = vlaneseq
        %v275 = vshrl.u32 %v274, 7
        %v276 = vsub.s32 2, %v275
        %v277 = vrot.slane %v225, %v276
        %v278 = vlaneseq
        %v279 = vshrl.u32 %v278, 7
        %v280 = vsub.s32 2, %v279
        %v281 = vrot.slane %v226, %v280
        %v282 = vmul.f32 %v273, %v277
        %v283 = vmul.f32 %v272, %v281
        %284 = vrot.lane.b32.xlu0 %v229, 1
        %v285 = vpop.permute.xlu0 %284
        %286 = vrot.lane.b32.xlu0 %v230, 1
        %v287 = vpop.permute.xlu0 %286
        %vm288 = vcmp.lt.s32.totalorder %v236, 1
        %v289 = vsel %vm288, %v285, %v287
        %v290 = vsel %vm288, %v287, %v285
        %v291 = vlaneseq
        %v292 = vshrl.u32 %v291, 7
        %v293 = vsub.s32 3, %v292
        %v294 = vrot.slane %v225, %v293
        %v295 = vlaneseq
        %v296 = vshrl.u32 %v295, 7
        %v297 = vsub.s32 3, %v296
        %v298 = vrot.slane %v226, %v297
        %v299 = vmul.f32 %v290, %v294
        %v300 = vmul.f32 %v289, %v298
        %301 = vrot.lane.b32.xlu0 %v229, 127
        %v302 = vpop.permute.xlu0 %301
        %303 = vrot.lane.b32.xlu0 %v230, 127
        %v304 = vpop.permute.xlu0 %303
        %vm305 = vcmp.lt.s32.totalorder %v236, 127
        %v306 = vsel %vm305, %v302, %v304
        %v307 = vsel %vm305, %v304, %v302
        %v308 = vlaneseq
        %v309 = vshrl.u32 %v308, 7
        %v310 = vsub.s32 5, %v309
        %v311 = vrot.slane %v225, %v310
        %v312 = vlaneseq
        %v313 = vshrl.u32 %v312, 7
        %v314 = vsub.s32 5, %v313
        %v315 = vrot.slane %v226, %v314
        %v316 = vmul.f32 %v306, %v311
        %v317 = vmul.f32 %v307, %v315
        %318 = vrot.lane.b32.xlu0 %v229, 113
        %v319 = vpop.permute.xlu0 %318
        %320 = vrot.lane.b32.xlu0 %v230, 113
        %v321 = vpop.permute.xlu0 %320
        %vm322 = vcmp.lt.s32.totalorder %v236, 113
        %v323 = vsel %vm322, %v319, %v321
        %v324 = vsel %vm322, %v321, %v319
        %v325 = vlaneseq
        %v326 = vshrl.u32 %v325, 7
        %v327 = vsub.s32 6, %v326
        %v328 = vrot.slane %v225, %v327
        %v329 = vlaneseq
        %v330 = vshrl.u32 %v329, 7
        %v331 = vsub.s32 6, %v330
        %v332 = vrot.slane %v226, %v331
        %v333 = vmul.f32 %v323, %v328
        %v334 = vmul.f32 %v324, %v332
        %335 = vrot.lane.b32.xlu0 %v229, 112
        %v336 = vpop.permute.xlu0 %335
        %337 = vrot.lane.b32.xlu0 %v230, 112
        %v338 = vpop.permute.xlu0 %337
        %vm339 = vcmp.lt.s32.totalorder %v236, 112
        %v340 = vsel %vm339, %v336, %v338
        %v341 = vsel %vm339, %v338, %v336
        %v342 = vlaneseq
        %v343 = vshrl.u32 %v342, 7
        %v344 = vsub.s32 7, %v343
        %v345 = vrot.slane %v225, %v344
        %v346 = vlaneseq
        %v347 = vshrl.u32 %v346, 7
        %v348 = vsub.s32 7, %v347
        %v349 = vrot.slane %v226, %v348
        %v350 = vmul.f32 %v340, %v345
        %v351 = vmul.f32 %v341, %v349
        %352 = vrot.lane.b32.xlu0 %v229, 111
        %v353 = vpop.permute.xlu0 %352
        %354 = vrot.lane.b32.xlu0 %v230, 111
        %v355 = vpop.permute.xlu0 %354
        %vm356 = vcmp.lt.s32.totalorder %v236, 111
        %v357 = vsel %vm356, %v353, %v355
        %v358 = vsel %vm356, %v355, %v353
        %v359 = vlaneseq
        %v360 = vshrl.u32 %v359, 7
        %v361 = vsub.s32 0, %v360
        %v362 = vrot.slane %v227, %v361
        %v363 = vlaneseq
        %v364 = vshrl.u32 %v363, 7
        %v365 = vsub.s32 0, %v364
        %v366 = vrot.slane %v228, %v365
        %v367 = vmul.f32 %v357, %v362
        %v368 = vmul.f32 %v358, %v366
        %vm369 = vcmask 588800
        %v371 = vsel %vm369, %v221, 0
        %v374 = vsel %vm369, %v222, 0
        %v377 = vsel %vm369, %v223, 0
        %v380 = vsel %vm369, %v224, 0
        %382 = vmatprep.subr.mxu0 0.0
        %383 = vmatpush1.msra.mxu0 0.0
        %384 = vmatprep.subr.mxu0 0.0
        %385 = vmatpush1.msra.mxu0 0.0
        %386 = vmatprep.subr.mxu0 0.0
        %387 = vmatpush1.msra.mxu0 0.0
        %388 = vmatprep.subr.mxu0 0.0
        %389 = vmatpush1.msra.mxu0 0.0
        %390 = vmatprep.subr.mxu0 0.0
        %391 = vmatpush1.msra.mxu0 0.0
        %392 = vmatprep.subr.mxu0 0.0
        %393 = vmatpush1.msra.mxu0 0.0
        %394 = vmatprep.subr.mxu0 0.0
        %395 = vmatpush1.msra.mxu0 0.0
        %396 = vmatprep.subr.mxu0 %v368
        %397 = vmatpush1.msra.mxu0 %v367
        %398 = vmatprep.subr.mxu0 %v351
        %399 = vmatpush1.msra.mxu0 %v350
        %400 = vmatprep.subr.mxu0 %v334
        %401 = vmatpush1.msra.mxu0 %v333
        %402 = vmatprep.subr.mxu0 %v317
        %403 = vmatpush1.msra.mxu0 %v316
        %404 = vmatprep.subr.mxu0 %v230
        %405 = vmatpush1.msra.mxu0 %v229
        %406 = vmatprep.subr.mxu0 %v300
        %407 = vmatpush1.msra.mxu0 %v299
        %408 = vmatprep.subr.mxu0 %v283
        %409 = vmatpush1.msra.mxu0 %v282
        %410 = vmatprep.subr.mxu0 %v266
        %411 = vmatpush1.msra.mxu0 %v265
        %412 = vmatprep.subr.mxu0 %v249
        %413 = vmatpush1.msra.mxu0 %v248
        %414 = vmatprep.subr.mxu0 0.0
        %415 = vmatpush2.msra.mxu0 0.0
        %416 = vmatprep.subr.mxu0 0.0
        %417 = vmatpush2.msra.mxu0 0.0
        %418 = vmatprep.subr.mxu0 0.0
        %419 = vmatpush2.msra.mxu0 0.0
        %420 = vmatprep.subr.mxu0 0.0
        %421 = vmatpush2.msra.mxu0 0.0
        %422 = vmatprep.subr.mxu0 0.0
        %423 = vmatpush2.msra.mxu0 0.0
        %424 = vmatprep.subr.mxu0 0.0
        %425 = vmatpush2.msra.mxu0 0.0
        %426 = vmatprep.subr.mxu0 0.0
        %427 = vmatpush2.msra.mxu0 0.0
        %428 = vmatprep.subr.mxu0 0.0
        %429 = vmatpush2.msra.mxu0 0.0
        %430 = vmatprep.subr.mxu0 0.0
        %431 = vmatpush2.msra.mxu0 0.0
        %432 = vmatprep.subr.mxu0 0.0
        %433 = vmatpush2.msra.mxu0 0.0
        %434 = vmatprep.subr.mxu0 0.0
        %435 = vmatpush2.msra.mxu0 0.0
        %436 = vmatprep.subr.mxu0 0.0
        %437 = vmatpush2.msra.mxu0 0.0
        %438 = vmatprep.subr.mxu0 0.0
        %439 = vmatpush2.msra.mxu0 0.0
        %440 = vmatprep.subr.mxu0 0.0
        %441 = vmatpush2.msra.mxu0 0.0
        %442 = vmatprep.subr.mxu0 0.0
        %443 = vmatpush2.msra.mxu0 0.0
        %444 = vmatprep.subr.mxu0 0.0
        %445 = vmatpush2.msra.mxu0 0.0
        %446 = vmatprep.mubr.f32.mxu0 0.0
        %447 = vmatmul.mubr.f32.gmra.mxu0 %v371
        %v448 = vpop.f32.mrf.mxu0
        %v449 = vadd.f32 0.0, %v448
        %v450 = vpop.f32.mrf.mxu0
        %v451 = vadd.f32 0.0, %v450
        %452 = vmatprep.mubr.f32.mxu0 0.0
        %453 = vmatmul.mubr.f32.gmra.mxu0 %v374
        %v454 = vpop.f32.mrf.mxu0
        %v455 = vadd.f32 0.0, %v454
        %v456 = vpop.f32.mrf.mxu0
        %v457 = vadd.f32 0.0, %v456
        %458 = vmatprep.mubr.f32.mxu0 0.0
        %459 = vmatmul.mubr.f32.gmra.mxu0 %v377
        %v460 = vpop.f32.mrf.mxu0
        %v461 = vadd.f32 0.0, %v460
        %v462 = vpop.f32.mrf.mxu0
        %v463 = vadd.f32 0.0, %v462
        %464 = vmatprep.mubr.f32.mxu0 0.0
        %465 = vmatmul.mubr.f32.gmra.mxu0 %v380
        %v466 = vpop.f32.mrf.mxu0
        %v467 = vadd.f32 0.0, %v466
        %v468 = vpop.f32.mrf.mxu0
        %v469 = vadd.f32 0.0, %v468
        %470 = vdwg.mxu0
        %vm471 = vcmp.ge.f32.partialorder %v449, 0.0
        %vm472 = vcmp.ge.f32.partialorder %v451, 0.0
        %vm473 = vcmp.ge.f32.partialorder %v455, 0.0
        %vm474 = vcmp.ge.f32.partialorder %v457, 0.0
        %vm475 = vcmp.ge.f32.partialorder %v461, 0.0
        %vm476 = vcmp.ge.f32.partialorder %v463, 0.0
        %vm477 = vcmp.ge.f32.partialorder %v467, 0.0
        %vm478 = vcmp.ge.f32.partialorder %v469, 0.0
        %v479 = vmul.f32 %v449, 0.01
        %v480 = vmul.f32 %v451, 0.01
        %v481 = vmul.f32 %v455, 0.01
        %v482 = vmul.f32 %v457, 0.01
        %v483 = vmul.f32 %v461, 0.01
        %v484 = vmul.f32 %v463, 0.01
        %v485 = vmul.f32 %v467, 0.01
        %v486 = vmul.f32 %v469, 0.01
        %v487 = vsel %vm471, %v449, %v479
        %v488 = vsel %vm472, %v451, %v480
        %v489 = vsel %vm473, %v455, %v481
        %v490 = vsel %vm474, %v457, %v482
        %v491 = vsel %vm475, %v461, %v483
        %v492 = vsel %vm476, %v463, %v484
        %v493 = vsel %vm477, %v467, %v485
        %v494 = vsel %vm478, %v469, %v486
        %495 = vst [vmem:[%s218] sm:$0xff] %v487
        %496 = vst [vmem:[%s218 + $0x8] sm:$0xff] %v488
        %497 = vst [vmem:[%s218 + $0x10] sm:$0xff] %v489
        %498 = vst [vmem:[%s218 + $0x18] sm:$0xff] %v490
        %499 = vst [vmem:[%s218 + $0x20] sm:$0xff] %v491
        %500 = vst [vmem:[%s218 + $0x28] sm:$0xff] %v492
        %501 = vst [vmem:[%s218 + $0x30] sm:$0xff] %v493
        %502 = vst [vmem:[%s218 + $0x38] sm:$0xff] %v494
        %s503 = scalar_lea.vmem %s188, 16 [#allocation2]
        %v504 = vld [vmem:[%s503] sm:$0xff]
        %v505 = vld [vmem:[%s503 + $0x8] sm:$0xff]
        %506 = vrot.lane.b32.xlu0 %v504, 17
        %v507 = vpop.permute.xlu0 %506
        %508 = vrot.lane.b32.xlu0 %v505, 17
        %v509 = vpop.permute.xlu0 %508
        %v510 = vsel %vm237, %v507, %v509
        %v511 = vsel %vm237, %v509, %v507
        %v512 = vmul.f32 %v511, %v243
        %v513 = vmul.f32 %v510, %v247
        %514 = vrot.lane.b32.xlu0 %v504, 16
        %v515 = vpop.permute.xlu0 %514
        %516 = vrot.lane.b32.xlu0 %v505, 16
        %v517 = vpop.permute.xlu0 %516
        %v518 = vsel %vm254, %v515, %v517
        %v519 = vsel %vm254, %v517, %v515
        %v520 = vmul.f32 %v519, %v260
        %v521 = vmul.f32 %v518, %v264
        %522 = vrot.lane.b32.xlu0 %v504, 15
        %v523 = vpop.permute.xlu0 %522
        %524 = vrot.lane.b32.xlu0 %v505, 15
        %v525 = vpop.permute.xlu0 %524
        %v526 = vsel %vm271, %v523, %v525
        %v527 = vsel %vm271, %v525, %v523
        %v528 = vmul.f32 %v527, %v277
        %v529 = vmul.f32 %v526, %v281
        %530 = vrot.lane.b32.xlu0 %v504, 1
        %v531 = vpop.permute.xlu0 %530
        %532 = vrot.lane.b32.xlu0 %v505, 1
        %v533 = vpop.permute.xlu0 %532
        %v534 = vsel %vm288, %v531, %v533
        %v535 = vsel %vm288, %v533, %v531
        %v536 = vmul.f32 %v535, %v294
        %v537 = vmul.f32 %v534, %v298
        %538 = vrot.lane.b32.xlu0 %v504, 127
        %v539 = vpop.permute.xlu0 %538
        %540 = vrot.lane.b32.xlu0 %v505, 127
        %v541 = vpop.permute.xlu0 %540
        %v542 = vsel %vm305, %v539, %v541
        %v543 = vsel %vm305, %v541, %v539
        %v544 = vmul.f32 %v542, %v311
        %v545 = vmul.f32 %v543, %v315
        %546 = vrot.lane.b32.xlu0 %v504, 113
        %v547 = vpop.permute.xlu0 %546
        %548 = vrot.lane.b32.xlu0 %v505, 113
        %v549 = vpop.permute.xlu0 %548
        %v550 = vsel %vm322, %v547, %v549
        %v551 = vsel %vm322, %v549, %v547
        %v552 = vmul.f32 %v550, %v328
        %v553 = vmul.f32 %v551, %v332
        %554 = vrot.lane.b32.xlu0 %v504, 112
        %v555 = vpop.permute.xlu0 %554
        %556 = vrot.lane.b32.xlu0 %v505, 112
        %v557 = vpop.permute.xlu0 %556
        %v558 = vsel %vm339, %v555, %v557
        %v559 = vsel %vm339, %v557, %v555
        %v560 = vmul.f32 %v558, %v345
        %v561 = vmul.f32 %v559, %v349
        %562 = vrot.lane.b32.xlu0 %v504, 111
        %v563 = vpop.permute.xlu0 %562
        %564 = vrot.lane.b32.xlu0 %v505, 111
        %v565 = vpop.permute.xlu0 %564
        %v566 = vsel %vm356, %v563, %v565
        %v567 = vsel %vm356, %v565, %v563
        %v568 = vmul.f32 %v566, %v362
        %v569 = vmul.f32 %v567, %v366
        %570 = vmatprep.subr.mxu0 0.0
        %571 = vmatpush1.msra.mxu0 0.0
        %572 = vmatprep.subr.mxu0 0.0
        %573 = vmatpush1.msra.mxu0 0.0
        %574 = vmatprep.subr.mxu0 0.0
        %575 = vmatpush1.msra.mxu0 0.0
        %576 = vmatprep.subr.mxu0 0.0
        %577 = vmatpush1.msra.mxu0 0.0
        %578 = vmatprep.subr.mxu0 0.0
        %579 = vmatpush1.msra.mxu0 0.0
        %580 = vmatprep.subr.mxu0 0.0
        %581 = vmatpush1.msra.mxu0 0.0
        %582 = vmatprep.subr.mxu0 0.0
        %583 = vmatpush1.msra.mxu0 0.0
        %584 = vmatprep.subr.mxu0 %v569
        %585 = vmatpush1.msra.mxu0 %v568
        %586 = vmatprep.subr.mxu0 %v561
        %587 = vmatpush1.msra.mxu0 %v560
        %588 = vmatprep.subr.mxu0 %v553
        %589 = vmatpush1.msra.mxu0 %v552
        %590 = vmatprep.subr.mxu0 %v545
        %591 = vmatpush1.msra.mxu0 %v544
        %592 = vmatprep.subr.mxu0 %v505
        %593 = vmatpush1.msra.mxu0 %v504
        %594 = vmatprep.subr.mxu0 %v537
        %595 = vmatpush1.msra.mxu0 %v536
        %596 = vmatprep.subr.mxu0 %v529
        %597 = vmatpush1.msra.mxu0 %v528
        %598 = vmatprep.subr.mxu0 %v521
        %599 = vmatpush1.msra.mxu0 %v520
        %600 = vmatprep.subr.mxu0 %v513
        %601 = vmatpush1.msra.mxu0 %v512
        %602 = vmatprep.subr.mxu0 0.0
        %603 = vmatpush2.msra.mxu0 0.0
        %604 = vmatprep.subr.mxu0 0.0
        %605 = vmatpush2.msra.mxu0 0.0
        %606 = vmatprep.subr.mxu0 0.0
        %607 = vmatpush2.msra.mxu0 0.0
        %608 = vmatprep.subr.mxu0 0.0
        %609 = vmatpush2.msra.mxu0 0.0
        %610 = vmatprep.subr.mxu0 0.0
        %611 = vmatpush2.msra.mxu0 0.0
        %612 = vmatprep.subr.mxu0 0.0
        %613 = vmatpush2.msra.mxu0 0.0
        %614 = vmatprep.subr.mxu0 0.0
        %615 = vmatpush2.msra.mxu0 0.0
        %616 = vmatprep.subr.mxu0 0.0
        %617 = vmatpush2.msra.mxu0 0.0
        %618 = vmatprep.subr.mxu0 0.0
        %619 = vmatpush2.msra.mxu0 0.0
        %620 = vmatprep.subr.mxu0 0.0
        %621 = vmatpush2.msra.mxu0 0.0
        %622 = vmatprep.subr.mxu0 0.0
        %623 = vmatpush2.msra.mxu0 0.0
        %624 = vmatprep.subr.mxu0 0.0
        %625 = vmatpush2.msra.mxu0 0.0
        %626 = vmatprep.subr.mxu0 0.0
        %627 = vmatpush2.msra.mxu0 0.0
        %628 = vmatprep.subr.mxu0 0.0
        %629 = vmatpush2.msra.mxu0 0.0
        %630 = vmatprep.subr.mxu0 0.0
        %631 = vmatpush2.msra.mxu0 0.0
        %632 = vmatprep.subr.mxu0 0.0
        %633 = vmatpush2.msra.mxu0 0.0
        %634 = vmatprep.mubr.f32.mxu0 0.0
        %635 = vmatmul.mubr.f32.gmra.mxu0 %v371
        %v636 = vpop.f32.mrf.mxu0
        %v637 = vadd.f32 0.0, %v636
        %v638 = vpop.f32.mrf.mxu0
        %v639 = vadd.f32 0.0, %v638
        %640 = vmatprep.mubr.f32.mxu0 0.0
        %641 = vmatmul.mubr.f32.gmra.mxu0 %v374
        %v642 = vpop.f32.mrf.mxu0
        %v643 = vadd.f32 0.0, %v642
        %v644 = vpop.f32.mrf.mxu0
        %v645 = vadd.f32 0.0, %v644
        %646 = vmatprep.mubr.f32.mxu0 0.0
        %647 = vmatmul.mubr.f32.gmra.mxu0 %v377
        %v648 = vpop.f32.mrf.mxu0
        %v649 = vadd.f32 0.0, %v648
        %v650 = vpop.f32.mrf.mxu0
        %v651 = vadd.f32 0.0, %v650
        %652 = vmatprep.mubr.f32.mxu0 0.0
        %653 = vmatmul.mubr.f32.gmra.mxu0 %v380
        %v654 = vpop.f32.mrf.mxu0
        %v655 = vadd.f32 0.0, %v654
        %v656 = vpop.f32.mrf.mxu0
        %v657 = vadd.f32 0.0, %v656
        %658 = vdwg.mxu0
        %vm659 = vcmp.ge.f32.partialorder %v637, 0.0
        %vm660 = vcmp.ge.f32.partialorder %v639, 0.0
        %vm661 = vcmp.ge.f32.partialorder %v643, 0.0
        %vm662 = vcmp.ge.f32.partialorder %v645, 0.0
        %vm663 = vcmp.ge.f32.partialorder %v649, 0.0
        %vm664 = vcmp.ge.f32.partialorder %v651, 0.0
        %vm665 = vcmp.ge.f32.partialorder %v655, 0.0
        %vm666 = vcmp.ge.f32.partialorder %v657, 0.0
        %v667 = vmul.f32 %v637, 0.01
        %v668 = vmul.f32 %v639, 0.01
        %v669 = vmul.f32 %v643, 0.01
        %v670 = vmul.f32 %v645, 0.01
        %v671 = vmul.f32 %v649, 0.01
        %v672 = vmul.f32 %v651, 0.01
        %v673 = vmul.f32 %v655, 0.01
        %v674 = vmul.f32 %v657, 0.01
        %v675 = vsel %vm659, %v637, %v667
        %v676 = vsel %vm660, %v639, %v668
        %v677 = vsel %vm661, %v643, %v669
        %v678 = vsel %vm662, %v645, %v670
        %v679 = vsel %vm663, %v649, %v671
        %v680 = vsel %vm664, %v651, %v672
        %v681 = vsel %vm665, %v655, %v673
        %v682 = vsel %vm666, %v657, %v674
        %s683 = scalar_lea.vmem %s218, 64 [#allocation8]
        %684 = vst [vmem:[%s683] sm:$0xff] %v675
        %685 = vst [vmem:[%s683 + $0x8] sm:$0xff] %v676
        %686 = vst [vmem:[%s683 + $0x10] sm:$0xff] %v677
        %687 = vst [vmem:[%s683 + $0x18] sm:$0xff] %v678
        %688 = vst [vmem:[%s683 + $0x20] sm:$0xff] %v679
        %689 = vst [vmem:[%s683 + $0x28] sm:$0xff] %v680
        %690 = vst [vmem:[%s683 + $0x30] sm:$0xff] %v681
        %691 = vst [vmem:[%s683 + $0x38] sm:$0xff] %v682
        %s692 = scalar_lea.vmem %s188, 32 [#allocation2]
        %v693 = vld [vmem:[%s692] sm:$0xff]
        %v694 = vld [vmem:[%s692 + $0x8] sm:$0xff]
        %695 = vrot.lane.b32.xlu0 %v693, 17
        %v696 = vpop.permute.xlu0 %695
        %697 = vrot.lane.b32.xlu0 %v694, 17
        %v698 = vpop.permute.xlu0 %697
        %v699 = vsel %vm237, %v696, %v698
        %v700 = vsel %vm237, %v698, %v696
        %v701 = vmul.f32 %v700, %v243
        %v702 = vmul.f32 %v699, %v247
        %703 = vrot.lane.b32.xlu0 %v693, 16
        %v704 = vpop.permute.xlu0 %703
        %705 = vrot.lane.b32.xlu0 %v694, 16
        %v706 = vpop.permute.xlu0 %705
        %v707 = vsel %vm254, %v704, %v706
        %v708 = vsel %vm254, %v706, %v704
        %v709 = vmul.f32 %v708, %v260
        %v710 = vmul.f32 %v707, %v264
        %711 = vrot.lane.b32.xlu0 %v693, 15
        %v712 = vpop.permute.xlu0 %711
        %713 = vrot.lane.b32.xlu0 %v694, 15
        %v714 = vpop.permute.xlu0 %713
        %v715 = vsel %vm271, %v712, %v714
        %v716 = vsel %vm271, %v714, %v712
        %v717 = vmul.f32 %v716, %v277
        %v718 = vmul.f32 %v715, %v281
        %719 = vrot.lane.b32.xlu0 %v693, 1
        %v720 = vpop.permute.xlu0 %719
        %721 = vrot.lane.b32.xlu0 %v694, 1
        %v722 = vpop.permute.xlu0 %721
        %v723 = vsel %vm288, %v720, %v722
        %v724 = vsel %vm288, %v722, %v720
        %v725 = vmul.f32 %v724, %v294
        %v726 = vmul.f32 %v723, %v298
        %727 = vrot.lane.b32.xlu0 %v693, 127
        %v728 = vpop.permute.xlu0 %727
        %729 = vrot.lane.b32.xlu0 %v694, 127
        %v730 = vpop.permute.xlu0 %729
        %v731 = vsel %vm305, %v728, %v730
        %v732 = vsel %vm305, %v730, %v728
        %v733 = vmul.f32 %v731, %v311
        %v734 = vmul.f32 %v732, %v315
        %735 = vrot.lane.b32.xlu0 %v693, 113
        %v736 = vpop.permute.xlu0 %735
        %737 = vrot.lane.b32.xlu0 %v694, 113
        %v738 = vpop.permute.xlu0 %737
        %v739 = vsel %vm322, %v736, %v738
        %v740 = vsel %vm322, %v738, %v736
        %v741 = vmul.f32 %v739, %v328
        %v742 = vmul.f32 %v740, %v332
        %743 = vrot.lane.b32.xlu0 %v693, 112
        %v744 = vpop.permute.xlu0 %743
        %745 = vrot.lane.b32.xlu0 %v694, 112
        %v746 = vpop.permute.xlu0 %745
        %v747 = vsel %vm339, %v744, %v746
        %v748 = vsel %vm339, %v746, %v744
        %v749 = vmul.f32 %v747, %v345
        %v750 = vmul.f32 %v748, %v349
        %751 = vrot.lane.b32.xlu0 %v693, 111
        %v752 = vpop.permute.xlu0 %751
        %753 = vrot.lane.b32.xlu0 %v694, 111
        %v754 = vpop.permute.xlu0 %753
        %v755 = vsel %vm356, %v752, %v754
        %v756 = vsel %vm356, %v754, %v752
        %v757 = vmul.f32 %v755, %v362
        %v758 = vmul.f32 %v756, %v366
        %759 = vmatprep.subr.mxu0 0.0
        %760 = vmatpush1.msra.mxu0 0.0
        %761 = vmatprep.subr.mxu0 0.0
        %762 = vmatpush1.msra.mxu0 0.0
        %763 = vmatprep.subr.mxu0 0.0
        %764 = vmatpush1.msra.mxu0 0.0
        %765 = vmatprep.subr.mxu0 0.0
        %766 = vmatpush1.msra.mxu0 0.0
        %767 = vmatprep.subr.mxu0 0.0
        %768 = vmatpush1.msra.mxu0 0.0
        %769 = vmatprep.subr.mxu0 0.0
        %770 = vmatpush1.msra.mxu0 0.0
        %771 = vmatprep.subr.mxu0 0.0
        %772 = vmatpush1.msra.mxu0 0.0
        %773 = vmatprep.subr.mxu0 %v758
        %774 = vmatpush1.msra.mxu0 %v757
        %775 = vmatprep.subr.mxu0 %v750
        %776 = vmatpush1.msra.mxu0 %v749
        %777 = vmatprep.subr.mxu0 %v742
        %778 = vmatpush1.msra.mxu0 %v741
        %779 = vmatprep.subr.mxu0 %v734
        %780 = vmatpush1.msra.mxu0 %v733
        %781 = vmatprep.subr.mxu0 %v694
        %782 = vmatpush1.msra.mxu0 %v693
        %783 = vmatprep.subr.mxu0 %v726
        %784 = vmatpush1.msra.mxu0 %v725
        %785 = vmatprep.subr.mxu0 %v718
        %786 = vmatpush1.msra.mxu0 %v717
        %787 = vmatprep.subr.mxu0 %v710
        %788 = vmatpush1.msra.mxu0 %v709
        %789 = vmatprep.subr.mxu0 %v702
        %790 = vmatpush1.msra.mxu0 %v701
        %791 = vmatprep.subr.mxu0 0.0
        %792 = vmatpush2.msra.mxu0 0.0
        %793 = vmatprep.subr.mxu0 0.0
        %794 = vmatpush2.msra.mxu0 0.0
        %795 = vmatprep.subr.mxu0 0.0
        %796 = vmatpush2.msra.mxu0 0.0
        %797 = vmatprep.subr.mxu0 0.0
        %798 = vmatpush2.msra.mxu0 0.0
        %799 = vmatprep.subr.mxu0 0.0
        %800 = vmatpush2.msra.mxu0 0.0
        %801 = vmatprep.subr.mxu0 0.0
        %802 = vmatpush2.msra.mxu0 0.0
        %803 = vmatprep.subr.mxu0 0.0
        %804 = vmatpush2.msra.mxu0 0.0
        %805 = vmatprep.subr.mxu0 0.0
        %806 = vmatpush2.msra.mxu0 0.0
        %807 = vmatprep.subr.mxu0 0.0
        %808 = vmatpush2.msra.mxu0 0.0
        %809 = vmatprep.subr.mxu0 0.0
        %810 = vmatpush2.msra.mxu0 0.0
        %811 = vmatprep.subr.mxu0 0.0
        %812 = vmatpush2.msra.mxu0 0.0
        %813 = vmatprep.subr.mxu0 0.0
        %814 = vmatpush2.msra.mxu0 0.0
        %815 = vmatprep.subr.mxu0 0.0
        %816 = vmatpush2.msra.mxu0 0.0
        %817 = vmatprep.subr.mxu0 0.0
        %818 = vmatpush2.msra.mxu0 0.0
        %819 = vmatprep.subr.mxu0 0.0
        %820 = vmatpush2.msra.mxu0 0.0
        %821 = vmatprep.subr.mxu0 0.0
        %822 = vmatpush2.msra.mxu0 0.0
        %823 = vmatprep.mubr.f32.mxu0 0.0
        %824 = vmatmul.mubr.f32.gmra.mxu0 %v371
        %v825 = vpop.f32.mrf.mxu0
        %v826 = vadd.f32 0.0, %v825
        %v827 = vpop.f32.mrf.mxu0
        %v828 = vadd.f32 0.0, %v827
        %829 = vmatprep.mubr.f32.mxu0 0.0
        %830 = vmatmul.mubr.f32.gmra.mxu0 %v374
        %v831 = vpop.f32.mrf.mxu0
        %v832 = vadd.f32 0.0, %v831
        %v833 = vpop.f32.mrf.mxu0
        %v834 = vadd.f32 0.0, %v833
        %835 = vmatprep.mubr.f32.mxu0 0.0
        %836 = vmatmul.mubr.f32.gmra.mxu0 %v377
        %v837 = vpop.f32.mrf.mxu0
        %v838 = vadd.f32 0.0, %v837
        %v839 = vpop.f32.mrf.mxu0
        %v840 = vadd.f32 0.0, %v839
        %841 = vmatprep.mubr.f32.mxu0 0.0
        %842 = vmatmul.mubr.f32.gmra.mxu0 %v380
        %v843 = vpop.f32.mrf.mxu0
        %v844 = vadd.f32 0.0, %v843
        %v845 = vpop.f32.mrf.mxu0
        %v846 = vadd.f32 0.0, %v845
        %847 = vdwg.mxu0
        %vm848 = vcmp.ge.f32.partialorder %v826, 0.0
        %vm849 = vcmp.ge.f32.partialorder %v828, 0.0
        %vm850 = vcmp.ge.f32.partialorder %v832, 0.0
        %vm851 = vcmp.ge.f32.partialorder %v834, 0.0
        %vm852 = vcmp.ge.f32.partialorder %v838, 0.0
        %vm853 = vcmp.ge.f32.partialorder %v840, 0.0
        %vm854 = vcmp.ge.f32.partialorder %v844, 0.0
        %vm855 = vcmp.ge.f32.partialorder %v846, 0.0
        %v856 = vmul.f32 %v826, 0.01
        %v857 = vmul.f32 %v828, 0.01
        %v858 = vmul.f32 %v832, 0.01
        %v859 = vmul.f32 %v834, 0.01
        %v860 = vmul.f32 %v838, 0.01
        %v861 = vmul.f32 %v840, 0.01
        %v862 = vmul.f32 %v844, 0.01
        %v863 = vmul.f32 %v846, 0.01
        %v864 = vsel %vm848, %v826, %v856
        %v865 = vsel %vm849, %v828, %v857
        %v866 = vsel %vm850, %v832, %v858
        %v867 = vsel %vm851, %v834, %v859
        %v868 = vsel %vm852, %v838, %v860
        %v869 = vsel %vm853, %v840, %v861
        %v870 = vsel %vm854, %v844, %v862
        %v871 = vsel %vm855, %v846, %v863
        %s872 = scalar_lea.vmem %s218, 128 [#allocation8]
        %873 = vst [vmem:[%s872] sm:$0xff] %v864
        %874 = vst [vmem:[%s872 + $0x8] sm:$0xff] %v865
        %875 = vst [vmem:[%s872 + $0x10] sm:$0xff] %v866
        %876 = vst [vmem:[%s872 + $0x18] sm:$0xff] %v867
        %877 = vst [vmem:[%s872 + $0x20] sm:$0xff] %v868
        %878 = vst [vmem:[%s872 + $0x28] sm:$0xff] %v869
        %879 = vst [vmem:[%s872 + $0x30] sm:$0xff] %v870
        %880 = vst [vmem:[%s872 + $0x38] sm:$0xff] %v871
        %s881 = scalar_lea.vmem %s188, 48 [#allocation2]
        %v882 = vld [vmem:[%s881] sm:$0xff]
        %v883 = vld [vmem:[%s881 + $0x8] sm:$0xff]
        %884 = vrot.lane.b32.xlu0 %v882, 17
        %v885 = vpop.permute.xlu0 %884
        %886 = vrot.lane.b32.xlu0 %v883, 17
        %v887 = vpop.permute.xlu0 %886
        %v888 = vsel %vm237, %v885, %v887
        %v889 = vsel %vm237, %v887, %v885
        %v890 = vmul.f32 %v889, %v243
        %v891 = vmul.f32 %v888, %v247
        %892 = vrot.lane.b32.xlu0 %v882, 16
        %v893 = vpop.permute.xlu0 %892
        %894 = vrot.lane.b32.xlu0 %v883, 16
        %v895 = vpop.permute.xlu0 %894
        %v896 = vsel %vm254, %v893, %v895
        %v897 = vsel %vm254, %v895, %v893
        %v898 = vmul.f32 %v897, %v260
        %v899 = vmul.f32 %v896, %v264
        %900 = vrot.lane.b32.xlu0 %v882, 15
        %v901 = vpop.permute.xlu0 %900
        %902 = vrot.lane.b32.xlu0 %v883, 15
        %v903 = vpop.permute.xlu0 %902
        %v904 = vsel %vm271, %v901, %v903
        %v905 = vsel %vm271, %v903, %v901
        %v906 = vmul.f32 %v905, %v277
        %v907 = vmul.f32 %v904, %v281
        %908 = vrot.lane.b32.xlu0 %v882, 1
        %v909 = vpop.permute.xlu0 %908
        %910 = vrot.lane.b32.xlu0 %v883, 1
        %v911 = vpop.permute.xlu0 %910
        %v912 = vsel %vm288, %v909, %v911
        %v913 = vsel %vm288, %v911, %v909
        %v914 = vmul.f32 %v913, %v294
        %v915 = vmul.f32 %v912, %v298
        %916 = vrot.lane.b32.xlu0 %v882, 127
        %v917 = vpop.permute.xlu0 %916
        %918 = vrot.lane.b32.xlu0 %v883, 127
        %v919 = vpop.permute.xlu0 %918
        %v920 = vsel %vm305, %v917, %v919
        %v921 = vsel %vm305, %v919, %v917
        %v922 = vmul.f32 %v920, %v311
        %v923 = vmul.f32 %v921, %v315
        %924 = vrot.lane.b32.xlu0 %v882, 113
        %v925 = vpop.permute.xlu0 %924
        %926 = vrot.lane.b32.xlu0 %v883, 113
        %v927 = vpop.permute.xlu0 %926
        %v928 = vsel %vm322, %v925, %v927
        %v929 = vsel %vm322, %v927, %v925
        %v930 = vmul.f32 %v928, %v328
        %v931 = vmul.f32 %v929, %v332
        %932 = vrot.lane.b32.xlu0 %v882, 112
        %v933 = vpop.permute.xlu0 %932
        %934 = vrot.lane.b32.xlu0 %v883, 112
        %v935 = vpop.permute.xlu0 %934
        %v936 = vsel %vm339, %v933, %v935
        %v937 = vsel %vm339, %v935, %v933
        %v938 = vmul.f32 %v936, %v345
        %v939 = vmul.f32 %v937, %v349
        %940 = vrot.lane.b32.xlu0 %v882, 111
        %v941 = vpop.permute.xlu0 %940
        %942 = vrot.lane.b32.xlu0 %v883, 111
        %v943 = vpop.permute.xlu0 %942
        %v944 = vsel %vm356, %v941, %v943
        %v945 = vsel %vm356, %v943, %v941
        %v946 = vmul.f32 %v944, %v362
        %v947 = vmul.f32 %v945, %v366
        %948 = vmatprep.subr.mxu0 0.0
        %949 = vmatpush1.msra.mxu0 0.0
        %950 = vmatprep.subr.mxu0 0.0
        %951 = vmatpush1.msra.mxu0 0.0
        %952 = vmatprep.subr.mxu0 0.0
        %953 = vmatpush1.msra.mxu0 0.0
        %954 = vmatprep.subr.mxu0 0.0
        %955 = vmatpush1.msra.mxu0 0.0
        %956 = vmatprep.subr.mxu0 0.0
        %957 = vmatpush1.msra.mxu0 0.0
        %958 = vmatprep.subr.mxu0 0.0
        %959 = vmatpush1.msra.mxu0 0.0
        %960 = vmatprep.subr.mxu0 0.0
        %961 = vmatpush1.msra.mxu0 0.0
        %962 = vmatprep.subr.mxu0 %v947
        %963 = vmatpush1.msra.mxu0 %v946
        %964 = vmatprep.subr.mxu0 %v939
        %965 = vmatpush1.msra.mxu0 %v938
        %966 = vmatprep.subr.mxu0 %v931
        %967 = vmatpush1.msra.mxu0 %v930
        %968 = vmatprep.subr.mxu0 %v923
        %969 = vmatpush1.msra.mxu0 %v922
        %970 = vmatprep.subr.mxu0 %v883
        %971 = vmatpush1.msra.mxu0 %v882
        %972 = vmatprep.subr.mxu0 %v915
        %973 = vmatpush1.msra.mxu0 %v914
        %974 = vmatprep.subr.mxu0 %v907
        %975 = vmatpush1.msra.mxu0 %v906
        %976 = vmatprep.subr.mxu0 %v899
        %977 = vmatpush1.msra.mxu0 %v898
        %978 = vmatprep.subr.mxu0 %v891
        %979 = vmatpush1.msra.mxu0 %v890
        %980 = vmatprep.subr.mxu0 0.0
        %981 = vmatpush2.msra.mxu0 0.0
        %982 = vmatprep.subr.mxu0 0.0
        %983 = vmatpush2.msra.mxu0 0.0
        %984 = vmatprep.subr.mxu0 0.0
        %985 = vmatpush2.msra.mxu0 0.0
        %986 = vmatprep.subr.mxu0 0.0
        %987 = vmatpush2.msra.mxu0 0.0
        %988 = vmatprep.subr.mxu0 0.0
        %989 = vmatpush2.msra.mxu0 0.0
        %990 = vmatprep.subr.mxu0 0.0
        %991 = vmatpush2.msra.mxu0 0.0
        %992 = vmatprep.subr.mxu0 0.0
        %993 = vmatpush2.msra.mxu0 0.0
        %994 = vmatprep.subr.mxu0 0.0
        %995 = vmatpush2.msra.mxu0 0.0
        %996 = vmatprep.subr.mxu0 0.0
        %997 = vmatpush2.msra.mxu0 0.0
        %998 = vmatprep.subr.mxu0 0.0
        %999 = vmatpush2.msra.mxu0 0.0
        %1000 = vmatprep.subr.mxu0 0.0
        %1001 = vmatpush2.msra.mxu0 0.0
        %1002 = vmatprep.subr.mxu0 0.0
        %1003 = vmatpush2.msra.mxu0 0.0
        %1004 = vmatprep.subr.mxu0 0.0
        %1005 = vmatpush2.msra.mxu0 0.0
        %1006 = vmatprep.subr.mxu0 0.0
        %1007 = vmatpush2.msra.mxu0 0.0
        %1008 = vmatprep.subr.mxu0 0.0
        %1009 = vmatpush2.msra.mxu0 0.0
        %1010 = vmatprep.subr.mxu0 0.0
        %1011 = vmatpush2.msra.mxu0 0.0
        %1012 = vmatprep.mubr.f32.mxu0 0.0
        %1013 = vmatmul.mubr.f32.gmra.mxu0 %v371
        %v1014 = vpop.f32.mrf.mxu0
        %v1015 = vadd.f32 0.0, %v1014
        %v1016 = vpop.f32.mrf.mxu0
        %v1017 = vadd.f32 0.0, %v1016
        %1018 = vmatprep.mubr.f32.mxu0 0.0
        %1019 = vmatmul.mubr.f32.gmra.mxu0 %v374
        %v1020 = vpop.f32.mrf.mxu0
        %v1021 = vadd.f32 0.0, %v1020
        %v1022 = vpop.f32.mrf.mxu0
        %v1023 = vadd.f32 0.0, %v1022
        %1024 = vmatprep.mubr.f32.mxu0 0.0
        %1025 = vmatmul.mubr.f32.gmra.mxu0 %v377
        %v1026 = vpop.f32.mrf.mxu0
        %v1027 = vadd.f32 0.0, %v1026
        %v1028 = vpop.f32.mrf.mxu0
        %v1029 = vadd.f32 0.0, %v1028
        %1030 = vmatprep.mubr.f32.mxu0 0.0
        %1031 = vmatmul.mubr.f32.gmra.mxu0 %v380
        %v1032 = vpop.f32.mrf.mxu0
        %v1033 = vadd.f32 0.0, %v1032
        %v1034 = vpop.f32.mrf.mxu0
        %v1035 = vadd.f32 0.0, %v1034
        %1036 = vdwg.mxu0
        %vm1037 = vcmp.ge.f32.partialorder %v1015, 0.0
        %vm1038 = vcmp.ge.f32.partialorder %v1017, 0.0
        %vm1039 = vcmp.ge.f32.partialorder %v1021, 0.0
        %vm1040 = vcmp.ge.f32.partialorder %v1023, 0.0
        %vm1041 = vcmp.ge.f32.partialorder %v1027, 0.0
        %vm1042 = vcmp.ge.f32.partialorder %v1029, 0.0
        %vm1043 = vcmp.ge.f32.partialorder %v1033, 0.0
        %vm1044 = vcmp.ge.f32.partialorder %v1035, 0.0
        %v1045 = vmul.f32 %v1015, 0.01
        %v1046 = vmul.f32 %v1017, 0.01
        %v1047 = vmul.f32 %v1021, 0.01
        %v1048 = vmul.f32 %v1023, 0.01
        %v1049 = vmul.f32 %v1027, 0.01
        %v1050 = vmul.f32 %v1029, 0.01
        %v1051 = vmul.f32 %v1033, 0.01
        %v1052 = vmul.f32 %v1035, 0.01
        %v1053 = vsel %vm1037, %v1015, %v1045
        %v1054 = vsel %vm1038, %v1017, %v1046
        %v1055 = vsel %vm1039, %v1021, %v1047
        %v1056 = vsel %vm1040, %v1023, %v1048
        %v1057 = vsel %vm1041, %v1027, %v1049
        %v1058 = vsel %vm1042, %v1029, %v1050
        %v1059 = vsel %vm1043, %v1033, %v1051
        %v1060 = vsel %vm1044, %v1035, %v1052
        %s1061 = scalar_lea.vmem %s218, 192 [#allocation8]
        %1062 = vst [vmem:[%s1061] sm:$0xff] %v1053
        %1063 = vst [vmem:[%s1061 + $0x8] sm:$0xff] %v1054
        %1064 = vst [vmem:[%s1061 + $0x10] sm:$0xff] %v1055
        %1065 = vst [vmem:[%s1061 + $0x18] sm:$0xff] %v1056
        %1066 = vst [vmem:[%s1061 + $0x20] sm:$0xff] %v1057
        %1067 = vst [vmem:[%s1061 + $0x28] sm:$0xff] %v1058
        %1068 = vst [vmem:[%s1061 + $0x30] sm:$0xff] %v1059
        %1069 = vst [vmem:[%s1061 + $0x38] sm:$0xff] %v1060
        %s1070 = sand.u32 %s97, 1
        %s1071 = scalar_lea.sflag [#allocation4], %s1070
        %s1072 = sand.u32 %s97, 1
        %s1073 = smul.addr %s1072, 256
        %s1074 = scalar_lea.vmem [#allocation8], %s1073
        // Predicated region
        $region45: #{tpu_custom_call.1} parent=31 // pred_check
          %p1075 = pneg %p107
        $region46: #{tpu_custom_call.1} parent=31 // pred_check_branch
          %1077 = sbr.rel (%p1075) target = $region48
        $region47: #{tpu_custom_call.1} parent=31 // pred_region
          %s1078 = smul.u32 4, %s21
          %s1080 = ssub.s32 4096, 4096
          %1081 = vsyncadd %s1071, %s1080
          %s1082 = smul.addr %s1078, 8
          %s1083 = smul.addr %s1082, 128
          %s1084 = scalar_lea.hbm %s3, %s1083
          %s1085 = sshll.u32 %s1074, 4
          %s1086 = int_to_ptr.vmem [resolvable:$true] %s1085
          %1091 = dma.vmem_to_hbm [thread:$0]  %s1086, 4096, %s1084, %s1071, 256, 256, 16
        $region48: #{tpu_custom_call.1} parent=31 // pred_fallthru
          _
      $region32: #{tpu_custom_call.1} parent=5 // pred_fallthru
        _
      %p1092 = scmp.le.s32.totalorder 2, %s16
      // Predicated region
      $region49: #{tpu_custom_call.1} parent=5 // pred_check
        %p1093 = pneg %p1092
      $region50: #{tpu_custom_call.1} parent=5 // pred_check_branch
        %1095 = sbr.rel (%p1093) target = $region52
      $region51: #{tpu_custom_call.1} parent=5 // pred_region
        %s1096 = ssub.s32 %s16, 2
        // Predicated region
        $region53: #{tpu_custom_call.1} parent=51 // pred_check
          %p1097 = pneg %p113
        $region54: #{tpu_custom_call.1} parent=51 // pred_check_branch
          %1099 = sbr.rel (%p1097) target = $region56
        $region55: #{tpu_custom_call.1} parent=51 // pred_region
          %s1100 = sand.u32 %s98, 1
          %s1101 = scalar_lea.sflag [#allocation4], %s1100
          %s1102 = sand.u32 %s98, 1
          %s1103 = smul.addr %s1102, 256
          %s1104 = scalar_lea.vmem [#allocation8], %s1103
          %1105 = dma.done %s1101, 4096
        $region56: #{tpu_custom_call.1} parent=51 // pred_fallthru
          _
      $region52: #{tpu_custom_call.1} parent=5 // pred_fallthru
        _
    $region6: #{tpu_custom_call.1} parent=1 // loop_footer
      %s20 = sadd.s32 1, %s16
    $region7: #{tpu_custom_call.1} parent=1 // loop_footer_branch
      %15 = sbr.rel target = $region3
    $region8: #{tpu_custom_call.1} parent=1 // loop_exit
      _
    %1106 = vsyncpa [#allocation3], 1
    %s1107 = scalar_lea.sflag [#allocation3], 1
    %1108 = vsyncpa %s1107, 1
    %1109 = vsyncpa [#allocation6], 1
    %1110 = vsyncpa [#allocation4], 1
    %s1111 = scalar_lea.sflag [#allocation4], 1
    %1112 = vsyncpa %s1111, 1

</llo_original>
